<compile_context>
chip_gen: v7x
topology: tpu7x:2x2x1
jax: 0.10.0
libtpu: 0.0.40
codegen_flags: <defaults>
</compile_context>

<pallas_src>
import functools

import jax
import jax.numpy as jnp
import numpy as np
from jax import lax
from jax.experimental import pallas as pl
from jax.experimental.pallas import tpu as pltpu


def _round_up(v, m):
    return (v + m - 1) // m * m


def _cdiv(a, b):
    return (a + b - 1) // b


def _select_tile(L, tile_l, N):
    """Pick (T, nT): as few / as large lane-dense tiles as possible with
    minimal L_p = nT*T overshoot; keep >= 2 parallel grid steps for v7x."""
    tile_l = max(128, tile_l)
    nT = _cdiv(L, tile_l)
    T = _round_up(_cdiv(L, nT), 128)
    nT = _cdiv(L, T)
    if N * nT < 2 and L > 128:          # v7x: 2 TensorCores want >= 2 steps
        nT = 2
        T = _round_up(_cdiv(L, nT), 128)
        nT = _cdiv(L, T)
    return T, nT


def _basic_block_kernel(x_hbm, w1_ref, w2_ref, wr_ref, br_ref, o_ref,
                        xbuf, copy_sem, *,
                        use_residual_conv, seq_len, tile_l, halo_w):
    T = tile_l
    W = halo_w                                  # T + 128 (lane-aligned window)
    n = pl.program_id(0)
    j = pl.program_id(1)

    # Haloed input window straight from HBM: x_pad columns [j*T, j*T + W),
    # i.e. x columns [j*T - 2, j*T + W - 2).  Strided DMA, no wrapper copy.
    start = pl.multiple_of(j * T, 128)
    cp = pltpu.make_async_copy(x_hbm.at[n, :, pl.ds(start, W)], xbuf, copy_sem)
    cp.start()
    cp.wait()

    xh = xbuf[...]                               # (Cin_p, W); xh[:, q] = x[j*T + q - 2]
    # Left-shift-by-k operands via cyclic roll (XLU); shift = W - k == -k mod W.
    xh1 = pltpu.roll(xh, shift=W - 1, axis=1)    # xh1[:, q] = xh[:, q+1] for q <= W-2
    xh2 = pltpu.roll(xh, shift=W - 2, axis=1)    # xh2[:, q] = xh[:, q+2] for q <= W-3

    # ---- conv1 (k=3, pad=1): three accumulating MXU matmuls ----------------
    h = jnp.dot(w1_ref[0], xh, preferred_element_type=jnp.float32)
    h = h + jnp.dot(w1_ref[1], xh1, preferred_element_type=jnp.float32)
    h = h + jnp.dot(w1_ref[2], xh2, preferred_element_type=jnp.float32)
    h = jnp.maximum(h, 0.0)                      # ReLU; (Cout_p, W) f32
    # dropout(p=0.2): identity under eval-mode (inference) semantics.
    # TODO(synk): training-mode stochastic dropout (pltpu.prng_*) not emitted.

    # h[:, p] is conv1 output at global column j*T - 1 + p; zero everything
    # outside [0, L) so conv2 sees the same zero padding as the PyTorch module.
    col = j * T - 1 + lax.broadcasted_iota(jnp.int32, h.shape, 1)
    h = jnp.where((col >= 0) & (col < seq_len), h, 0.0)

    # ---- conv2 (k=3, pad=1): same shifted-accumulate pattern, f32 acts -----
    h1 = pltpu.roll(h, shift=W - 1, axis=1)
    h2 = pltpu.roll(h, shift=W - 2, axis=1)
    out = jnp.dot(w2_ref[0], h, preferred_element_type=jnp.float32)
    out = out + jnp.dot(w2_ref[1], h1, preferred_element_type=jnp.float32)
    out = out + jnp.dot(w2_ref[2], h2, preferred_element_type=jnp.float32)
    # out[:, q] is conv2 output at global column j*T + q (exact for q < T).

    # ---- residual path ------------------------------------------------------
    xc = xh2[:, :T]                              # x at this tile's output columns
    if use_residual_conv:
        res = jnp.dot(wr_ref[...], xc, preferred_element_type=jnp.float32)
        res = res + br_ref[...].astype(jnp.float32)
    else:
        res = xc.astype(jnp.float32)

    o_ref[0] = jnp.maximum(out[:, :T] + res, 0.0).astype(o_ref.dtype)


def basic_block_forward(x, w1, w2, wr, br, *, tile_l=2048):
    """x: (N, C_in, L); w1: (C_out, C_in, 3); w2: (C_out, C_out, 3);
       wr: (C_out, C_in, 1); br: (C_out,)."""
    N, Cin, L = x.shape
    Cout = w1.shape[0]
    dt = x.dtype

    cin_p = _round_up(Cin, 8)
    cout_p = _round_up(Cout, 8)

    T, nT = _select_tile(L, tile_l, N)
    L_p = nT * T
    W = T + 128                      # haloed window width (multiple of 128)

    # One padded copy of x in HBM: column c of x_pad is x column c-2; the zero
    # pad doubles as the conv zero padding at the true sequence ends and lets
    # every per-tile window [j*T, j*T+W) stay in bounds.
    x_pad = jnp.pad(x, ((0, 0), (0, cin_p - Cin), (2, (L_p + 128) - L - 2)))

    def pad2(w, r, c):
        return jnp.pad(w, ((0, r - w.shape[0]), (0, c - w.shape[1])))

    # Stack the 3 taps along a leading axis; channels padded to sublane mults.
    w1s = jnp.stack([pad2(w1[:, :, k], cout_p, cin_p) for k in range(3)])
    w2s = jnp.stack([pad2(w2[:, :, k], cout_p, cout_p) for k in range(3)])
    wr2 = pad2(wr[:, :, 0], cout_p, cin_p)                 # (Cout_p, Cin_p)
    br2 = jnp.pad(br, (0, cout_p - Cout)).reshape(cout_p, 1)

    use_residual_conv = (Cout != Cin)
    kernel = functools.partial(_basic_block_kernel,
                               use_residual_conv=use_residual_conv,
                               seq_len=L, tile_l=T, halo_w=W)

    out = pl.pallas_call(
        kernel,
        out_shape=jax.ShapeDtypeStruct((N, cout_p, L_p), dt),
        grid_spec=pltpu.PrefetchScalarGridSpec(
            num_scalar_prefetch=0,
            grid=(N, nT),
            in_specs=[
                pl.BlockSpec(memory_space=pl.ANY),          # x_pad stays in HBM
                pl.BlockSpec((3, cout_p, cin_p), lambda n, j: (0, 0, 0)),
                pl.BlockSpec((3, cout_p, cout_p), lambda n, j: (0, 0, 0)),
                pl.BlockSpec((cout_p, cin_p), lambda n, j: (0, 0)),
                pl.BlockSpec((cout_p, 1), lambda n, j: (0, 0)),
            ],
            out_specs=pl.BlockSpec((1, cout_p, T), lambda n, j: (n, 0, j)),
            scratch_shapes=[
                pltpu.VMEM((cin_p, W), dt),                 # haloed input window
                pltpu.SemaphoreType.DMA(()),
            ],
        ),
        compiler_params=pltpu.CompilerParams(
            dimension_semantics=("parallel", "parallel"),
            vmem_limit_bytes=32 * 1024 * 1024),
    )(x_pad, w1s, w2s, wr2, br2)

    if cout_p == Cout and L_p == L:
        return out
    return out[:, :Cout, :L]


def basic_block_reference(x, w1, w2, wr, br):
    """Pure-JAX reference (mirrors the PyTorch forward in eval mode)."""
    dn = ("NCH", "OIH", "NCH")
    out = lax.conv_general_dilated(x, w1, window_strides=(1,),
                                   padding=((1, 1),), dimension_numbers=dn)
    out = jnp.maximum(out, 0.0)
    out = lax.conv_general_dilated(out, w2, window_strides=(1,),
                                   padding=((1, 1),), dimension_numbers=dn)
    residual = x
    if out.shape[1] != residual.shape[1]:
        residual = lax.conv_general_dilated(x, wr, window_strides=(1,),
                                            padding=((0, 0),),
                                            dimension_numbers=dn)
        residual = residual + br[None, :, None]
    return jnp.maximum(out + residual, 0.0)


if __name__ == "__main__":
    key = jax.random.PRNGKey(0)

    # Case 1: inplanes != planes (1x1 residual conv).
    N, Cin, Cout, L = 2, 4, 8, 300
    kx, k1, k2, kr, kb, key = jax.random.split(key, 6)
    x = jax.random.normal(kx, (N, Cin, L), dtype=jnp.float32)
    w1 = jax.random.normal(k1, (Cout, Cin, 3), dtype=jnp.float32) * 0.2
    w2 = jax.random.normal(k2, (Cout, Cout, 3), dtype=jnp.float32) * 0.2
    wr = jax.random.normal(kr, (Cout, Cin, 1), dtype=jnp.float32) * 0.2
    br = jax.random.normal(kb, (Cout,), dtype=jnp.float32) * 0.1
    ref = jax.block_until_ready(basic_block_reference(x, w1, w2, wr, br))

    # 1a: default large tile (single L tile per batch element).
    out = jax.block_until_ready(basic_block_forward(x, w1, w2, wr, br))
    np.testing.assert_allclose(np.asarray(out), np.asarray(ref),
                               rtol=1e-5, atol=1e-5)

    # 1b: small tile -> multiple L tiles, exercises the cross-tile halo DMA.
    out_b = jax.block_until_ready(
        basic_block_forward(x, w1, w2, wr, br, tile_l=128))
    np.testing.assert_allclose(np.asarray(out_b), np.asarray(ref),
                               rtol=1e-5, atol=1e-5)

    # Case 2: inplanes == planes (identity residual path), multi-tile.
    C2 = 8
    kx2, k12, k22, kr2, kb2, key = jax.random.split(key, 6)
    x2 = jax.random.normal(kx2, (N, C2, L), dtype=jnp.float32)
    w1b = jax.random.normal(k12, (C2, C2, 3), dtype=jnp.float32) * 0.2
    w2b = jax.random.normal(k22, (C2, C2, 3), dtype=jnp.float32) * 0.2
    wrb = jax.random.normal(kr2, (C2, C2, 1), dtype=jnp.float32) * 0.2
    brb = jax.random.normal(kb2, (C2,), dtype=jnp.float32) * 0.1

    out2 = jax.block_until_ready(
        basic_block_forward(x2, w1b, w2b, wrb, brb, tile_l=128))
    ref2 = jax.block_until_ready(basic_block_reference(x2, w1b, w2b, wrb, brb))
    np.testing.assert_allclose(np.asarray(out2), np.asarray(ref2),
                               rtol=1e-5, atol=1e-5)

    print("KERNEL_OK")
</pallas_src>

<mosaic_0001>
module attributes {stable_mosaic.version = 11 : i64} {
  func.func @_basic_block_kernel(%arg0: i32, %arg1: i32, %arg2: memref<2x8x512xf32, #tpu.memory_space<any>>, %arg3: memref<3x8x8xf32, #tpu.memory_space<vmem>>, %arg4: memref<3x8x8xf32, #tpu.memory_space<vmem>>, %arg5: memref<8x8xf32, #tpu.memory_space<vmem>>, %arg6: memref<8x1xf32, #tpu.memory_space<vmem>>, %arg7: memref<1x8x384xf32, #tpu.memory_space<vmem>>, %arg8: memref<8x512xf32, #tpu.memory_space<vmem>>, %arg9: memref<!tpu.dma_semaphore, #tpu.memory_space<semaphore_mem>>) attributes {dimension_semantics = [#tpu.dimension_semantics<parallel>, #tpu.dimension_semantics<parallel>], iteration_bounds = array<i64: 2, 1>, scalar_prefetch = 0 : i64, scratch_operands = 2 : i64, tpu.core_type = #tpu.core_type<tc>, window_params = [{}, {pipeline_mode = #tpu.pipeline_mode<synchronous>, transform_indices = @transform_1, window_bounds = array<i64: 3, 8, 8>}, {pipeline_mode = #tpu.pipeline_mode<synchronous>, transform_indices = @transform_2, window_bounds = array<i64: 3, 8, 8>}, {pipeline_mode = #tpu.pipeline_mode<synchronous>, transform_indices = @transform_3, window_bounds = array<i64: 8, 8>}, {pipeline_mode = #tpu.pipeline_mode<synchronous>, transform_indices = @transform_4, window_bounds = array<i64: 8, 1>}, {transform_indices = @transform_5, window_bounds = array<i64: 1, 8, 384>}]} {
    %c384_i32 = arith.constant 384 : i32
    %0 = arith.muli %arg1, %c384_i32 : i32
    %1 = tpu.assume_multiple %0, 128 : i32
    %c0_i32 = arith.constant 0 : i32
    %2 = tpu.memref_slice %arg2[%arg0, %c0_i32, %1] : memref<2x8x512xf32, #tpu.memory_space<any>> -> memref<1x8x512xf32, #tpu.memory_space<any>>
    %3 = tpu.memref_squeeze %2 : memref<1x8x512xf32, #tpu.memory_space<any>> -> memref<8x512xf32, #tpu.memory_space<any>>
    tpu.enqueue_dma source(%3 : memref<8x512xf32, #tpu.memory_space<any>>) target(%arg8 : memref<8x512xf32, #tpu.memory_space<vmem>>) target_semaphore(%arg9 : memref<!tpu.dma_semaphore, #tpu.memory_space<semaphore_mem>>)
    %c0_i32_0 = arith.constant 0 : i32
    %4 = tpu.memref_slice %arg2[%arg0, %c0_i32_0, %1] : memref<2x8x512xf32, #tpu.memory_space<any>> -> memref<1x8x512xf32, #tpu.memory_space<any>>
    %5 = tpu.memref_squeeze %4 : memref<1x8x512xf32, #tpu.memory_space<any>> -> memref<8x512xf32, #tpu.memory_space<any>>
    tpu.wait_dma2 semaphore(%arg9 : memref<!tpu.dma_semaphore, #tpu.memory_space<semaphore_mem>>) src(%5 : memref<8x512xf32, #tpu.memory_space<any>>) dst(%arg8 : memref<8x512xf32, #tpu.memory_space<vmem>>)
    %c0 = arith.constant 0 : index
    %c0_1 = arith.constant 0 : index
    %6 = vector.load %arg8[%c0, %c0_1] : memref<8x512xf32, #tpu.memory_space<vmem>>, vector<8x512xf32>
    %c511_i32 = arith.constant 511 : i32
    %7 = tpu.dynamic_rotate %6 by %c511_i32 dim 1 : vector<8x512xf32>, i32 -> vector<8x512xf32>
    %c510_i32 = arith.constant 510 : i32
    %8 = tpu.dynamic_rotate %6 by %c510_i32 dim 1 : vector<8x512xf32>, i32 -> vector<8x512xf32>
    %c0_2 = arith.constant 0 : index
    %c0_3 = arith.constant 0 : index
    %c0_4 = arith.constant 0 : index
    %9 = vector.load %arg3[%c0_2, %c0_3, %c0_4] : memref<3x8x8xf32, #tpu.memory_space<vmem>>, vector<1x8x8xf32>
    %10 = vector.shape_cast %9 : vector<1x8x8xf32> to vector<8x8xf32>
    %cst = arith.constant dense<0.000000e+00> : vector<8x512xf32>
    %11 = tpu.matmul %10, %6, %cst {dimension_numbers = #tpu.dot_dimension_numbers<[1], [0], [0], [1], [0, 0, 1, 1], [], []>} : vector<8x8xf32>, vector<8x512xf32>, vector<8x512xf32> -> vector<8x512xf32>
    %c1 = arith.constant 1 : index
    %c0_5 = arith.constant 0 : index
    %c0_6 = arith.constant 0 : index
    %12 = vector.load %arg3[%c1, %c0_5, %c0_6] : memref<3x8x8xf32, #tpu.memory_space<vmem>>, vector<1x8x8xf32>
    %13 = vector.shape_cast %12 : vector<1x8x8xf32> to vector<8x8xf32>
    %cst_7 = arith.constant dense<0.000000e+00> : vector<8x512xf32>
    %14 = tpu.matmul %13, %7, %cst_7 {dimension_numbers = #tpu.dot_dimension_numbers<[1], [0], [0], [1], [0, 0, 1, 1], [], []>} : vector<8x8xf32>, vector<8x512xf32>, vector<8x512xf32> -> vector<8x512xf32>
    %15 = arith.addf %11, %14 : vector<8x512xf32>
    %c2 = arith.constant 2 : index
    %c0_8 = arith.constant 0 : index
    %c0_9 = arith.constant 0 : index
    %16 = vector.load %arg3[%c2, %c0_8, %c0_9] : memref<3x8x8xf32, #tpu.memory_space<vmem>>, vector<1x8x8xf32>
    %17 = vector.shape_cast %16 : vector<1x8x8xf32> to vector<8x8xf32>
    %cst_10 = arith.constant dense<0.000000e+00> : vector<8x512xf32>
    %18 = tpu.matmul %17, %8, %cst_10 {dimension_numbers = #tpu.dot_dimension_numbers<[1], [0], [0], [1], [0, 0, 1, 1], [], []>} : vector<8x8xf32>, vector<8x512xf32>, vector<8x512xf32> -> vector<8x512xf32>
    %19 = arith.addf %15, %18 : vector<8x512xf32>
    %cst_11 = arith.constant 0.000000e+00 : f32
    %20 = vector.broadcast %cst_11 : f32 to vector<8x512xf32>
    %21 = arith.maximumf %19, %20 : vector<8x512xf32>
    %c384_i32_12 = arith.constant 384 : i32
    %22 = arith.muli %arg1, %c384_i32_12 : i32
    %c1_i32 = arith.constant 1 : i32
    %23 = arith.subi %22, %c1_i32 : i32
    %24 = tpu.iota {dimensions = array<i32: 1>} : vector<8x512xi32>
    %25 = vector.broadcast %23 : i32 to vector<8x512xi32>
    %26 = arith.addi %25, %24 : vector<8x512xi32>
    %c0_i32_13 = arith.constant 0 : i32
    %27 = vector.broadcast %c0_i32_13 : i32 to vector<8x512xi32>
    %28 = arith.cmpi sge, %26, %27 : vector<8x512xi32>
    %c300_i32 = arith.constant 300 : i32
    %29 = vector.broadcast %c300_i32 : i32 to vector<8x512xi32>
    %30 = arith.cmpi slt, %26, %29 : vector<8x512xi32>
    %31 = arith.andi %28, %30 : vector<8x512xi1>
    %cst_14 = arith.constant 0.000000e+00 : f32
    %32 = vector.broadcast %cst_14 : f32 to vector<8x512xf32>
    %33 = arith.select %31, %21, %32 : vector<8x512xi1>, vector<8x512xf32>
    %c511_i32_15 = arith.constant 511 : i32
    %34 = tpu.dynamic_rotate %33 by %c511_i32_15 dim 1 : vector<8x512xf32>, i32 -> vector<8x512xf32>
    %c510_i32_16 = arith.constant 510 : i32
    %35 = tpu.dynamic_rotate %33 by %c510_i32_16 dim 1 : vector<8x512xf32>, i32 -> vector<8x512xf32>
    %c0_17 = arith.constant 0 : index
    %c0_18 = arith.constant 0 : index
    %c0_19 = arith.constant 0 : index
    %36 = vector.load %arg4[%c0_17, %c0_18, %c0_19] : memref<3x8x8xf32, #tpu.memory_space<vmem>>, vector<1x8x8xf32>
    %37 = vector.shape_cast %36 : vector<1x8x8xf32> to vector<8x8xf32>
    %cst_20 = arith.constant dense<0.000000e+00> : vector<8x512xf32>
    %38 = tpu.matmul %37, %33, %cst_20 {dimension_numbers = #tpu.dot_dimension_numbers<[1], [0], [0], [1], [0, 0, 1, 1], [], []>} : vector<8x8xf32>, vector<8x512xf32>, vector<8x512xf32> -> vector<8x512xf32>
    %c1_21 = arith.constant 1 : index
    %c0_22 = arith.constant 0 : index
    %c0_23 = arith.constant 0 : index
    %39 = vector.load %arg4[%c1_21, %c0_22, %c0_23] : memref<3x8x8xf32, #tpu.memory_space<vmem>>, vector<1x8x8xf32>
    %40 = vector.shape_cast %39 : vector<1x8x8xf32> to vector<8x8xf32>
    %cst_24 = arith.constant dense<0.000000e+00> : vector<8x512xf32>
    %41 = tpu.matmul %40, %34, %cst_24 {dimension_numbers = #tpu.dot_dimension_numbers<[1], [0], [0], [1], [0, 0, 1, 1], [], []>} : vector<8x8xf32>, vector<8x512xf32>, vector<8x512xf32> -> vector<8x512xf32>
    %42 = arith.addf %38, %41 : vector<8x512xf32>
    %c2_25 = arith.constant 2 : index
    %c0_26 = arith.constant 0 : index
    %c0_27 = arith.constant 0 : index
    %43 = vector.load %arg4[%c2_25, %c0_26, %c0_27] : memref<3x8x8xf32, #tpu.memory_space<vmem>>, vector<1x8x8xf32>
    %44 = vector.shape_cast %43 : vector<1x8x8xf32> to vector<8x8xf32>
    %cst_28 = arith.constant dense<0.000000e+00> : vector<8x512xf32>
    %45 = tpu.matmul %44, %35, %cst_28 {dimension_numbers = #tpu.dot_dimension_numbers<[1], [0], [0], [1], [0, 0, 1, 1], [], []>} : vector<8x8xf32>, vector<8x512xf32>, vector<8x512xf32> -> vector<8x512xf32>
    %46 = arith.addf %42, %45 : vector<8x512xf32>
    %47 = vector.extract_strided_slice %8 {offsets = [0, 0], sizes = [8, 384], strides = [1, 1]} : vector<8x512xf32> to vector<8x384xf32>
    %c0_29 = arith.constant 0 : index
    %c0_30 = arith.constant 0 : index
    %48 = vector.load %arg5[%c0_29, %c0_30] : memref<8x8xf32, #tpu.memory_space<vmem>>, vector<8x8xf32>
    %cst_31 = arith.constant dense<0.000000e+00> : vector<8x384xf32>
    %49 = tpu.matmul %48, %47, %cst_31 {dimension_numbers = #tpu.dot_dimension_numbers<[1], [0], [0], [1], [0, 0, 1, 1], [], []>} : vector<8x8xf32>, vector<8x384xf32>, vector<8x384xf32> -> vector<8x384xf32>
    %c0_32 = arith.constant 0 : index
    %c0_33 = arith.constant 0 : index
    %50 = vector.load %arg6[%c0_32, %c0_33] : memref<8x1xf32, #tpu.memory_space<vmem>>, vector<8x1xf32>
    %51 = vector.broadcast %50 : vector<8x1xf32> to vector<8x384xf32>
    %52 = arith.addf %49, %51 : vector<8x384xf32>
    %53 = vector.extract_strided_slice %46 {offsets = [0, 0], sizes = [8, 384], strides = [1, 1]} : vector<8x512xf32> to vector<8x384xf32>
    %54 = arith.addf %53, %52 : vector<8x384xf32>
    %cst_34 = arith.constant 0.000000e+00 : f32
    %55 = vector.broadcast %cst_34 : f32 to vector<8x384xf32>
    %56 = arith.maximumf %54, %55 : vector<8x384xf32>
    %c0_35 = arith.constant 0 : index
    %c0_36 = arith.constant 0 : index
    %c0_37 = arith.constant 0 : index
    %57 = vector.load %arg7[%c0_35, %c0_36, %c0_37] : memref<1x8x384xf32, #tpu.memory_space<vmem>>, vector<1x8x384xf32>
    %58 = vector.shape_cast %57 : vector<1x8x384xf32> to vector<8x384xf32>
    %59 = vector.shape_cast %56 : vector<8x384xf32> to vector<1x8x384xf32>
    tpu.vector_store %arg7[%c0_35, %c0_36, %c0_37], %59 {strides = array<i32>} : memref<1x8x384xf32, #tpu.memory_space<vmem>>, vector<1x8x384xf32>,
    return
  }
  func.func @transform_1(%arg0: i32, %arg1: i32) -> (i32, i32, i32) {
    %c0_i32 = arith.constant 0 : i32
    %c0_i32_0 = arith.constant 0 : i32
    %c0_i32_1 = arith.constant 0 : i32
    %c0_i32_2 = arith.constant 0 : i32
    return %c0_i32, %c0_i32_0, %c0_i32_1 : i32, i32, i32
  }
  func.func @transform_2(%arg0: i32, %arg1: i32) -> (i32, i32, i32) {
    %c0_i32 = arith.constant 0 : i32
    %c0_i32_0 = arith.constant 0 : i32
    %c0_i32_1 = arith.constant 0 : i32
    %c0_i32_2 = arith.constant 0 : i32
    return %c0_i32, %c0_i32_0, %c0_i32_1 : i32, i32, i32
  }
  func.func @transform_3(%arg0: i32, %arg1: i32) -> (i32, i32) {
    %c0_i32 = arith.constant 0 : i32
    %c0_i32_0 = arith.constant 0 : i32
    %c0_i32_1 = arith.constant 0 : i32
    return %c0_i32, %c0_i32_0 : i32, i32
  }
  func.func @transform_4(%arg0: i32, %arg1: i32) -> (i32, i32) {
    %c0_i32 = arith.constant 0 : i32
    %c0_i32_0 = arith.constant 0 : i32
    %c0_i32_1 = arith.constant 0 : i32
    return %c0_i32, %c0_i32_0 : i32, i32
  }
  func.func @transform_5(%arg0: i32, %arg1: i32) -> (i32, i32, i32) {
    %c0_i32 = arith.constant 0 : i32
    %c0_i32_0 = arith.constant 0 : i32
    return %arg0, %c0_i32, %arg1 : i32, i32, i32
  }
}

</mosaic_0001>

<llo_original>
// kernel: tpu_custom_call.1
$region0: #{tpu_custom_call.1}
  #allocation0 [shape = 'u32[]', space=smem, size = 0x4, offset = 0x4, fixed_abs, tag = 'smem constant byte address 0x4 - core index']
  #allocation1 [shape = 'u32[144,128]{1,0:T(1,128)}', space=vmem, size = 0x12000, scoped, tag = 'internal scratch']
  #allocation2 [shape = 'f32[8,512]{1,0:T(8,128)}', space=vmem, size = 0x4000, scoped, tag = 'scratch operand']
  #allocation3 [shape = 's32[1]{0}', space=sflag, size = 0x4, scoped, tag = 'scratch operand']
  #allocation10 [shape = 's32[]', space=sflag, size = 0x4, offset = 0, fixed_abs, tag = 'sflag constant byte address 0x0 - dummy sync flag']
  #allocation11 [shape = 's32[]', space=sflag, size = 0x4, offset = 0, fixed_abs, tag = 'sflag constant byte address 0x0 - dummy sync flag']
  #allocation12 [shape = 'u32[]', space=smem, size = 0x4, offset = 0x44, fixed_abs, tag = 'smem constant byte address 0x44 - assertion arg 0']
  #allocation13 [shape = 'u32[]', space=smem, size = 0x4, offset = 0x48, fixed_abs, tag = 'smem constant byte address 0x48 - assertion arg 1']
  %s0 = inlined_call_operand.hbm [shape: f32[2,8,512], index: 0, kind: input, shape index: {}]
  %s1 = inlined_call_operand.hbm [shape: f32[3,8,8], index: 1, kind: input, shape index: {}]
  %s2 = inlined_call_operand.hbm [shape: f32[3,8,8], index: 2, kind: input, shape index: {}]
  %s3 = inlined_call_operand.vmem [shape: f32[8,8], index: 3, kind: input, shape index: {}]
  %s4 = inlined_call_operand.vmem [shape: f32[8,1], index: 4, kind: input, shape index: {}]
  %s5 = inlined_call_operand.hbm [shape: f32[2,8,384], index: 5, kind: output, shape index: {}]
  %s6 = sld [smem:[#allocation0]]
  $region61: #{tpu_custom_call.1} parent=0
    _
  %s8 = ssub.s32 1, %s6
  %s9 = scalar_select 0, %s8, %s6
  $region1: #{tpu_custom_call.1} parent=0
    #allocation4 [shape = 'u8[12288]{0}', space=vmem, size = 0x3000, scoped, tag = 'input window, operand 1, single buffered']
    #allocation5 [shape = 's32[2]{0}', space=sflag, size = 0x8, scoped, tag = 'scoped memory for tpu_custom_call.1']
    #allocation6 [shape = 's32[2]{0}', space=sflag, size = 0x8, scoped, tag = 'scoped memory for tpu_custom_call.1']
    #allocation7 [shape = 'u8[12288]{0}', space=vmem, size = 0x3000, scoped, tag = 'input window, operand 2, single buffered']
    #allocation8 [shape = 's32[1]{0}', space=sflag, size = 0x4, scoped, tag = 'scoped memory for tpu_custom_call.1']
    #allocation9 [shape = 'u8[24576]{0}', space=vmem, size = 0x6000, scoped, tag = 'output window, operand 0']
    %10 = vsyncpa [#allocation5], 0
    %11 = vsyncpa [#allocation8], 0
    %12 = vsyncpa [#allocation6], 0
    %s13 = scalar_lea.sflag [#allocation6], 1
    %14 = vsyncpa %s13, 0
    loop: start=0, step=1, limit=4
    $region2: #{tpu_custom_call.1} parent=1 // loop_pre_header
      _
    $region3: #{tpu_custom_call.1} parent=1 // loop_header
      %s16 = sphi 0, %s20
      %p17 = scmp.ge.s32.totalorder %s16, 4
      %s23 = sphi 0, %s35
      %s24 = sphi 0, %s31
      %s25 = sphi 0, %s23
      %s26 = sphi 0, %s24
      %s27 = sphi 0, %s25
      %s28 = sphi 0, %s26
      %s36 = sphi 0, %s36
      %s38 = sphi 0, %s36
      %s39 = sphi 0, %s38
      %s53 = sphi 0, %s39
      %s57 = sphi 0, %s57
      %s59 = sphi 0, %s57
      %s60 = sphi 0, %s59
      %s74 = sphi 0, %s60
      %s78 = sphi 0, %s78
      %s80 = sphi 0, %s78
      %s81 = sphi 0, %s80
      %s95 = sphi 0, %s81
      %s99 = sphi 0, %s99
      %s101 = sphi 0, %s99
      %s102 = sphi 0, %s101
      %s116 = sphi 0, %s102
      %s124 = sphi 0, %s126
      %s127 = sphi 0, %s124
      %s128 = sphi 0, %s127
      %s144 = sphi 0, %s128
    $region4: #{tpu_custom_call.1} parent=1 // loop_header_branch
      %19 = sbr.rel (%p17) target = $region8
    $region5: #{tpu_custom_call.1} parent=1 // loop_body
      %s21 = ssub.s32 %s16, 1
      %s22 = ssub.s32 %s16, 2
      %s29 = sadd.s32 1, %s24
      %p30 = scmp.ge.s32.totalorder %s29, 1
      %s31 = scalar_select %p30, 0, %s29
      %s32 = sadd.s32 1, %s23
      %s33 = scalar_select %p30, %s32, %s23
      %p34 = scmp.ge.s32.totalorder %s33, 2
      %s35 = scalar_select %p34, 0, %s33
      %s37 = sadd.s32 %s36, 1
      %p40 = scmp.eq.s32.totalorder %s16, 1
      %p41 = scmp.ne.s32.totalorder %s36, %s38
      %p42 = scmp.eq.s32.totalorder %s16, 0
      %p43 = por %p41, %p42
      %p44 = scmp.ne.s32.totalorder %s36, %s38
      %p45 = scmp.eq.s32.totalorder %s21, 1
      %p46 = por %p44, %p45
      %p47 = scmp.ne.s32.totalorder %s38, %s39
      %p48 = scmp.eq.s32.totalorder %s21, 0
      %p49 = por %p47, %p48
      %p50 = scmp.ne.s32.totalorder %s38, %s39
      %p51 = scmp.eq.s32.totalorder %s22, 1
      %p52 = por %p50, %p51
      %p54 = scmp.ne.s32.totalorder %s39, %s53
      %p55 = scmp.eq.s32.totalorder %s22, 0
      %p56 = por %p54, %p55
      %s58 = sadd.s32 %s57, 1
      %p61 = scmp.eq.s32.totalorder %s16, 1
      %p62 = scmp.ne.s32.totalorder %s57, %s59
      %p63 = scmp.eq.s32.totalorder %s16, 0
      %p64 = por %p62, %p63
      %p65 = scmp.ne.s32.totalorder %s57, %s59
      %p66 = scmp.eq.s32.totalorder %s21, 1
      %p67 = por %p65, %p66
      %p68 = scmp.ne.s32.totalorder %s59, %s60
      %p69 = scmp.eq.s32.totalorder %s21, 0
      %p70 = por %p68, %p69
      %p71 = scmp.ne.s32.totalorder %s59, %s60
      %p72 = scmp.eq.s32.totalorder %s22, 1
      %p73 = por %p71, %p72
      %p75 = scmp.ne.s32.totalorder %s60, %s74
      %p76 = scmp.eq.s32.totalorder %s22, 0
      %p77 = por %p75, %p76
      %s79 = sadd.s32 %s78, 1
      %p82 = scmp.eq.s32.totalorder %s16, 1
      %p83 = scmp.ne.s32.totalorder %s78, %s80
      %p84 = scmp.eq.s32.totalorder %s16, 0
      %p85 = por %p83, %p84
      %p86 = scmp.ne.s32.totalorder %s78, %s80
      %p87 = scmp.eq.s32.totalorder %s21, 1
      %p88 = por %p86, %p87
      %p89 = scmp.ne.s32.totalorder %s80, %s81
      %p90 = scmp.eq.s32.totalorder %s21, 0
      %p91 = por %p89, %p90
      %p92 = scmp.ne.s32.totalorder %s80, %s81
      %p93 = scmp.eq.s32.totalorder %s22, 1
      %p94 = por %p92, %p93
      %p96 = scmp.ne.s32.totalorder %s81, %s95
      %p97 = scmp.eq.s32.totalorder %s22, 0
      %p98 = por %p96, %p97
      %s100 = sadd.s32 %s99, 1
      %p103 = scmp.eq.s32.totalorder %s16, 1
      %p104 = scmp.ne.s32.totalorder %s99, %s101
      %p105 = scmp.eq.s32.totalorder %s16, 0
      %p106 = por %p104, %p105
      %p107 = scmp.ne.s32.totalorder %s99, %s101
      %p108 = scmp.eq.s32.totalorder %s21, 1
      %p109 = por %p107, %p108
      %p110 = scmp.ne.s32.totalorder %s101, %s102
      %p111 = scmp.eq.s32.totalorder %s21, 0
      %p112 = por %p110, %p111
      %p113 = scmp.ne.s32.totalorder %s101, %s102
      %p114 = scmp.eq.s32.totalorder %s22, 1
      %p115 = por %p113, %p114
      %p117 = scmp.ne.s32.totalorder %s102, %s116
      %p118 = scmp.eq.s32.totalorder %s22, 0
      %p119 = por %p117, %p118
      %s120 = ssub.s32 %s23, %s35
      %s121 = ssub.s32 %s24, %s31
      %s122 = sor.u32 %s120, %s121
      %p123 = scmp.eq.s32.totalorder %s122, 0
      %s125 = sadd.s32 %s124, 1
      %s126 = scalar_select %p123, %s124, %s125
      %p129 = pneg %p123
      %p130 = scmp.eq.s32.totalorder %s16, 1
      %p131 = por %p129, %p130
      %p132 = scmp.ne.s32.totalorder %s124, %s127
      %p133 = scmp.eq.s32.totalorder %s16, 0
      %p134 = por %p132, %p133
      %p135 = scmp.ne.s32.totalorder %s124, %s127
      %p136 = scmp.eq.s32.totalorder %s21, 1
      %p137 = por %p135, %p136
      %p138 = scmp.ne.s32.totalorder %s127, %s128
      %p139 = scmp.eq.s32.totalorder %s21, 0
      %p140 = por %p138, %p139
      %p141 = scmp.ne.s32.totalorder %s127, %s128
      %p142 = scmp.eq.s32.totalorder %s22, 1
      %p143 = por %p141, %p142
      %p145 = scmp.ne.s32.totalorder %s128, %s144
      %p146 = scmp.eq.s32.totalorder %s22, 0
      %p147 = por %p145, %p146
      %p148 = scmp.le.s32.totalorder 1, %s16
      %p149 = scmp.lt.s32.totalorder %s16, 3
      %p150 = pnand %p148, %p149
      %p151 = pneg %p150
      // Predicated region
      $region9: #{tpu_custom_call.1} parent=5 // pred_check
        _
      $region10: #{tpu_custom_call.1} parent=5 // pred_check_branch
        %153 = sbr.rel (%p150) target = $region12
      $region11: #{tpu_custom_call.1} parent=5 // pred_region
        %s154 = ssub.s32 %s16, 1
        // Predicated region
        $region13: #{tpu_custom_call.1} parent=11 // pred_check
          %p155 = pneg %p49
        $region14: #{tpu_custom_call.1} parent=11 // pred_check_branch
          %157 = sbr.rel (%p155) target = $region16
        $region15: #{tpu_custom_call.1} parent=11 // pred_region
          %s159 = ssub.s32 384, 384
          %160 = vsyncadd [#allocation5], %s159
          %s161 = sshll.u32 [#allocation4], 4
          %s162 = int_to_ptr.vmem [resolvable:$true] %s161
          %167 = dma.hbm_to_vmem [thread:$0]  %s1, 384, %s162, [#allocation5], 128, 128, 8
        $region16: #{tpu_custom_call.1} parent=11 // pred_fallthru
          _
        // Predicated region
        $region17: #{tpu_custom_call.1} parent=11 // pred_check
          %p168 = pneg %p70
        $region18: #{tpu_custom_call.1} parent=11 // pred_check_branch
          %170 = sbr.rel (%p168) target = $region20
        $region19: #{tpu_custom_call.1} parent=11 // pred_region
          %s172 = ssub.s32 384, 384
          %173 = vsyncadd [#allocation8], %s172
          %s174 = sshll.u32 [#allocation7], 4
          %s175 = int_to_ptr.vmem [resolvable:$true] %s174
          %180 = dma.hbm_to_vmem [thread:$0]  %s2, 384, %s175, [#allocation8], 128, 128, 8
        $region20: #{tpu_custom_call.1} parent=11 // pred_fallthru
          _
        // Predicated region
        $region21: #{tpu_custom_call.1} parent=11 // pred_check
          %p181 = pneg %p91
        $region22: #{tpu_custom_call.1} parent=11 // pred_check_branch
          %183 = sbr.rel (%p181) target = $region24
        $region23: #{tpu_custom_call.1} parent=11 // pred_region
          _
        $region24: #{tpu_custom_call.1} parent=11 // pred_fallthru
          _
        // Predicated region
        $region25: #{tpu_custom_call.1} parent=11 // pred_check
          %p184 = pneg %p112
        $region26: #{tpu_custom_call.1} parent=11 // pred_check_branch
          %186 = sbr.rel (%p184) target = $region28
        $region27: #{tpu_custom_call.1} parent=11 // pred_region
          _
        $region28: #{tpu_custom_call.1} parent=11 // pred_fallthru
          _
      $region12: #{tpu_custom_call.1} parent=5 // pred_fallthru
        _
      %p187 = scmp.lt.s32.totalorder %s16, 2
      // Predicated region
      $region29: #{tpu_custom_call.1} parent=5 // pred_check
        %p188 = pneg %p187
      $region30: #{tpu_custom_call.1} parent=5 // pred_check_branch
        %190 = sbr.rel (%p188) target = $region32
      $region31: #{tpu_custom_call.1} parent=5 // pred_region
        _
      $region32: #{tpu_custom_call.1} parent=5 // pred_fallthru
        _
      %p191 = scmp.le.s32.totalorder 1, %s16
      %p192 = scmp.lt.s32.totalorder %s16, 3
      %p193 = pnand %p191, %p192
      %p194 = pneg %p193
      // Predicated region
      $region33: #{tpu_custom_call.1} parent=5 // pred_check
        _
      $region34: #{tpu_custom_call.1} parent=5 // pred_check_branch
        %196 = sbr.rel (%p193) target = $region36
      $region35: #{tpu_custom_call.1} parent=5 // pred_region
        %s197 = ssub.s32 %s16, 1
        // Predicated region
        $region37: #{tpu_custom_call.1} parent=35 // pred_check
          %p198 = pneg %p49
        $region38: #{tpu_custom_call.1} parent=35 // pred_check_branch
          %200 = sbr.rel (%p198) target = $region40
        $region39: #{tpu_custom_call.1} parent=35 // pred_region
          %201 = dma.done [#allocation5], 384
        $region40: #{tpu_custom_call.1} parent=35 // pred_fallthru
          _
        // Predicated region
        $region41: #{tpu_custom_call.1} parent=35 // pred_check
          %p202 = pneg %p70
        $region42: #{tpu_custom_call.1} parent=35 // pred_check_branch
          %204 = sbr.rel (%p202) target = $region44
        $region43: #{tpu_custom_call.1} parent=35 // pred_region
          %205 = dma.done [#allocation8], 384
        $region44: #{tpu_custom_call.1} parent=35 // pred_fallthru
          _
        %p206 = pneg %p49
        %p207 = pneg %p46
        %p208 = pneg %p70
        %p209 = pneg %p67
        %p210 = pneg %p91
        %p211 = pneg %p88
        %p212 = pneg %p112
        %p213 = pneg %p109
        %p214 = pneg %p140
        %p215 = pneg %p137
        %s216 = sand.u32 %s127, 1
        %s217 = scalar_lea.sflag [#allocation6], %s216
        %s218 = sand.u32 %s127, 1
        %s219 = smul.addr %s218, 24
        %s220 = scalar_lea.vmem [#allocation9], %s219
        %s221 = smul.u32 3, %s26
        %s222 = smul.u32 %s26, 384
        %s223 = sshra.s32 %s222, 7
        %s224 = sand.u32 %s222, 127
        %s225 = smul.u32 %s25, 4
        %s226 = sadd.s32 %s223, %s225
        %s227 = smul.addr %s226, 128
        %s228 = scalar_lea.hbm %s0, %s227
        // Predicated region
        $region45: #{tpu_custom_call.1} parent=35 // pred_check
          _
        $region46: #{tpu_custom_call.1} parent=35 // pred_check_branch
          %230 = sbr.rel target = $region48
        $region47: #{tpu_custom_call.1} parent=35 // pred_region
          %231 = sst [smem:[#allocation12]] [#allocation11]
          %232 = sst [smem:[#allocation13]] [#allocation10]
        $region48: #{tpu_custom_call.1} parent=35 // pred_fallthru
          _
        %234 = shalt.err (0)
        %s236 = sshll.u32 [#allocation2], 4
        %s237 = int_to_ptr.vmem [resolvable:$true] %s236
        %239 = dma.hbm_to_vmem [thread:$0]  %s228, 512, %s237, [#allocation3]
        %s240 = smul.u32 8, 1
        %s241 = smul.u32 %s240, 4
        %s242 = sshll.u32 %s241, 4
        %243 = dma.done [#allocation3], %s242
        %v244 = vld [vmem:[#allocation2] sm:$0xff]
        %v245 = vld [vmem:[#allocation2 + $0x8] sm:$0xff]
        %v246 = vld [vmem:[#allocation2 + $0x10] sm:$0xff]
        %v247 = vld [vmem:[#allocation2 + $0x18] sm:$0xff]
        %248 = vrot.lane.b32.xlu0 %v244, 127
        %v249 = vpop.permute.xlu0 %248
        %250 = vrot.lane.b32.xlu0 %v245, 127
        %v251 = vpop.permute.xlu0 %250
        %252 = vrot.lane.b32.xlu0 %v246, 127
        %v253 = vpop.permute.xlu0 %252
        %254 = vrot.lane.b32.xlu0 %v247, 127
        %v255 = vpop.permute.xlu0 %254
        %v256 = vlaneseq
        %v257 = vand.u32 %v256, 127
        %vm258 = vcmp.lt.s32.totalorder %v257, 127
        %v259 = vsel %vm258, %v253, %v255
        %v260 = vsel %vm258, %v251, %v253
        %v261 = vsel %vm258, %v249, %v251
        %v262 = vsel %vm258, %v255, %v249
        %263 = vrot.lane.b32.xlu0 %v244, 126
        %v264 = vpop.permute.xlu0 %263
        %265 = vrot.lane.b32.xlu0 %v245, 126
        %v266 = vpop.permute.xlu0 %265
        %267 = vrot.lane.b32.xlu0 %v246, 126
        %v268 = vpop.permute.xlu0 %267
        %269 = vrot.lane.b32.xlu0 %v247, 126
        %v270 = vpop.permute.xlu0 %269
        %vm271 = vcmp.lt.s32.totalorder %v257, 126
        %v272 = vsel %vm271, %v268, %v270
        %v273 = vsel %vm271, %v266, %v268
        %v274 = vsel %vm271, %v264, %v266
        %v275 = vsel %vm271, %v270, %v264
        %v276 = vld [vmem:[#allocation4] sm:$0xff]
        %s277 = scalar_lea.vmem [#allocation4], 8
        %v278 = vld [vmem:[%s277] sm:$0xff]
        %vm279 = vcmask 64512
        %v281 = vsel %vm279, %v278, 0
        %283 = vmatprep.subr.mxu0 %v260
        %284 = vmatpush1.msra.mxu0 %v261
        %285 = vmatprep.subr.mxu0 0.0
        %286 = vmatpush1.msra.mxu0 0.0
        %287 = vmatprep.subr.mxu0 0.0
        %288 = vmatpush1.msra.mxu0 0.0
        %289 = vmatprep.subr.mxu0 0.0
        %290 = vmatpush1.msra.mxu0 0.0
        %291 = vmatprep.subr.mxu0 0.0
        %292 = vmatpush1.msra.mxu0 0.0
        %293 = vmatprep.subr.mxu0 0.0
        %294 = vmatpush1.msra.mxu0 0.0
        %295 = vmatprep.subr.mxu0 0.0
        %296 = vmatpush1.msra.mxu0 0.0
        %297 = vmatprep.subr.mxu0 0.0
        %298 = vmatpush1.msra.mxu0 0.0
        %299 = vmatprep.subr.mxu0 0.0
        %300 = vmatpush1.msra.mxu0 0.0
        %301 = vmatprep.subr.mxu0 0.0
        %302 = vmatpush1.msra.mxu0 0.0
        %303 = vmatprep.subr.mxu0 0.0
        %304 = vmatpush1.msra.mxu0 0.0
        %305 = vmatprep.subr.mxu0 0.0
        %306 = vmatpush1.msra.mxu0 0.0
        %307 = vmatprep.subr.mxu0 0.0
        %308 = vmatpush1.msra.mxu0 0.0
        %309 = vmatprep.subr.mxu0 0.0
        %310 = vmatpush1.msra.mxu0 0.0
        %311 = vmatprep.subr.mxu0 0.0
        %312 = vmatpush1.msra.mxu0 0.0
        %313 = vmatprep.subr.mxu0 0.0
        %314 = vmatpush1.msra.mxu0 0.0
        %315 = vmatprep.subr.mxu0 0.0
        %316 = vmatpush1.msra.mxu0 0.0
        %317 = vmatprep.subr.mxu0 0.0
        %318 = vmatpush1.msra.mxu0 0.0
        %319 = vmatprep.subr.mxu0 0.0
        %320 = vmatpush1.msra.mxu0 0.0
        %321 = vmatprep.subr.mxu0 0.0
        %322 = vmatpush1.msra.mxu0 0.0
        %323 = vmatprep.subr.mxu0 0.0
        %324 = vmatpush1.msra.mxu0 0.0
        %325 = vmatprep.subr.mxu0 0.0
        %326 = vmatpush1.msra.mxu0 0.0
        %327 = vmatprep.subr.mxu0 0.0
        %328 = vmatpush1.msra.mxu0 0.0
        %329 = vmatprep.subr.mxu0 0.0
        %330 = vmatpush1.msra.mxu0 0.0
        %331 = vmatprep.subr.mxu0 0.0
        %332 = vmatpush1.msra.mxu0 0.0
        %333 = vmatprep.subr.mxu0 0.0
        %334 = vmatpush1.msra.mxu0 0.0
        %335 = vmatprep.subr.mxu0 0.0
        %336 = vmatpush1.msra.mxu0 0.0
        %337 = vmatprep.subr.mxu0 0.0
        %338 = vmatpush1.msra.mxu0 0.0
        %339 = vmatprep.subr.mxu0 0.0
        %340 = vmatpush1.msra.mxu0 0.0
        %341 = vmatprep.subr.mxu0 0.0
        %342 = vmatpush1.msra.mxu0 0.0
        %343 = vmatprep.subr.mxu0 0.0
        %344 = vmatpush1.msra.mxu0 0.0
        %345 = vmatprep.subr.mxu0 0.0
        %346 = vmatpush1.msra.mxu0 0.0
        %347 = vmatprep.mubr.f32.mxu0 0.0
        %348 = vmatmul.mubr.f32.gmra.mrb[0].mxu0 %v281
        %v349 = vpop.f32.mrb[0].mxu0
        %v350 = vadd.f32 0.0, %v349
        %v351 = vpop.f32.mrb[0].mxu0
        %v352 = vadd.f32 0.0, %v351
        %353 = vdwg.mxu0
        %354 = vmatprep.subr.mxu0 %v262
        %355 = vmatpush1.msra.mxu0 %v259
        %356 = vmatprep.subr.mxu0 0.0
        %357 = vmatpush1.msra.mxu0 0.0
        %358 = vmatprep.subr.mxu0 0.0
        %359 = vmatpush1.msra.mxu0 0.0
        %360 = vmatprep.subr.mxu0 0.0
        %361 = vmatpush1.msra.mxu0 0.0
        %362 = vmatprep.subr.mxu0 0.0
        %363 = vmatpush1.msra.mxu0 0.0
        %364 = vmatprep.subr.mxu0 0.0
        %365 = vmatpush1.msra.mxu0 0.0
        %366 = vmatprep.subr.mxu0 0.0
        %367 = vmatpush1.msra.mxu0 0.0
        %368 = vmatprep.subr.mxu0 0.0
        %369 = vmatpush1.msra.mxu0 0.0
        %370 = vmatprep.subr.mxu0 0.0
        %371 = vmatpush1.msra.mxu0 0.0
        %372 = vmatprep.subr.mxu0 0.0
        %373 = vmatpush1.msra.mxu0 0.0
        %374 = vmatprep.subr.mxu0 0.0
        %375 = vmatpush1.msra.mxu0 0.0
        %376 = vmatprep.subr.mxu0 0.0
        %377 = vmatpush1.msra.mxu0 0.0
        %378 = vmatprep.subr.mxu0 0.0
        %379 = vmatpush1.msra.mxu0 0.0
        %380 = vmatprep.subr.mxu0 0.0
        %381 = vmatpush1.msra.mxu0 0.0
        %382 = vmatprep.subr.mxu0 0.0
        %383 = vmatpush1.msra.mxu0 0.0
        %384 = vmatprep.subr.mxu0 0.0
        %385 = vmatpush1.msra.mxu0 0.0
        %386 = vmatprep.subr.mxu0 0.0
        %387 = vmatpush1.msra.mxu0 0.0
        %388 = vmatprep.subr.mxu0 0.0
        %389 = vmatpush1.msra.mxu0 0.0
        %390 = vmatprep.subr.mxu0 0.0
        %391 = vmatpush1.msra.mxu0 0.0
        %392 = vmatprep.subr.mxu0 0.0
        %393 = vmatpush1.msra.mxu0 0.0
        %394 = vmatprep.subr.mxu0 0.0
        %395 = vmatpush1.msra.mxu0 0.0
        %396 = vmatprep.subr.mxu0 0.0
        %397 = vmatpush1.msra.mxu0 0.0
        %398 = vmatprep.subr.mxu0 0.0
        %399 = vmatpush1.msra.mxu0 0.0
        %400 = vmatprep.subr.mxu0 0.0
        %401 = vmatpush1.msra.mxu0 0.0
        %402 = vmatprep.subr.mxu0 0.0
        %403 = vmatpush1.msra.mxu0 0.0
        %404 = vmatprep.subr.mxu0 0.0
        %405 = vmatpush1.msra.mxu0 0.0
        %406 = vmatprep.subr.mxu0 0.0
        %407 = vmatpush1.msra.mxu0 0.0
        %408 = vmatprep.subr.mxu0 0.0
        %409 = vmatpush1.msra.mxu0 0.0
        %410 = vmatprep.subr.mxu0 0.0
        %411 = vmatpush1.msra.mxu0 0.0
        %412 = vmatprep.subr.mxu0 0.0
        %413 = vmatpush1.msra.mxu0 0.0
        %414 = vmatprep.subr.mxu0 0.0
        %415 = vmatpush1.msra.mxu0 0.0
        %416 = vmatprep.subr.mxu0 0.0
        %417 = vmatpush1.msra.mxu0 0.0
        %418 = vmatprep.mubr.f32.mxu0 0.0
        %419 = vmatmul.mubr.f32.gmra.mrb[0].mxu0 %v281
        %v420 = vpop.f32.mrb[0].mxu0
        %v421 = vadd.f32 0.0, %v420
        %v422 = vpop.f32.mrb[0].mxu0
        %v423 = vadd.f32 0.0, %v422
        %424 = vdwg.mxu0
        %v426 = vsel %vm279, %v276, 0
        %428 = vmatprep.subr.mxu0 %v245
        %429 = vmatpush1.msra.mxu0 %v244
        %430 = vmatprep.subr.mxu0 0.0
        %431 = vmatpush1.msra.mxu0 0.0
        %432 = vmatprep.subr.mxu0 0.0
        %433 = vmatpush1.msra.mxu0 0.0
        %434 = vmatprep.subr.mxu0 0.0
        %435 = vmatpush1.msra.mxu0 0.0
        %436 = vmatprep.subr.mxu0 0.0
        %437 = vmatpush1.msra.mxu0 0.0
        %438 = vmatprep.subr.mxu0 0.0
        %439 = vmatpush1.msra.mxu0 0.0
        %440 = vmatprep.subr.mxu0 0.0
        %441 = vmatpush1.msra.mxu0 0.0
        %442 = vmatprep.subr.mxu0 0.0
        %443 = vmatpush1.msra.mxu0 0.0
        %444 = vmatprep.subr.mxu0 0.0
        %445 = vmatpush1.msra.mxu0 0.0
        %446 = vmatprep.subr.mxu0 0.0
        %447 = vmatpush1.msra.mxu0 0.0
        %448 = vmatprep.subr.mxu0 0.0
        %449 = vmatpush1.msra.mxu0 0.0
        %450 = vmatprep.subr.mxu0 0.0
        %451 = vmatpush1.msra.mxu0 0.0
        %452 = vmatprep.subr.mxu0 0.0
        %453 = vmatpush1.msra.mxu0 0.0
        %454 = vmatprep.subr.mxu0 0.0
        %455 = vmatpush1.msra.mxu0 0.0
        %456 = vmatprep.subr.mxu0 0.0
        %457 = vmatpush1.msra.mxu0 0.0
        %458 = vmatprep.subr.mxu0 0.0
        %459 = vmatpush1.msra.mxu0 0.0
        %460 = vmatprep.subr.mxu0 0.0
        %461 = vmatpush1.msra.mxu0 0.0
        %462 = vmatprep.subr.mxu0 0.0
        %463 = vmatpush1.msra.mxu0 0.0
        %464 = vmatprep.subr.mxu0 0.0
        %465 = vmatpush1.msra.mxu0 0.0
        %466 = vmatprep.subr.mxu0 0.0
        %467 = vmatpush1.msra.mxu0 0.0
        %468 = vmatprep.subr.mxu0 0.0
        %469 = vmatpush1.msra.mxu0 0.0
        %470 = vmatprep.subr.mxu0 0.0
        %471 = vmatpush1.msra.mxu0 0.0
        %472 = vmatprep.subr.mxu0 0.0
        %473 = vmatpush1.msra.mxu0 0.0
        %474 = vmatprep.subr.mxu0 0.0
        %475 = vmatpush1.msra.mxu0 0.0
        %476 = vmatprep.subr.mxu0 0.0
        %477 = vmatpush1.msra.mxu0 0.0
        %478 = vmatprep.subr.mxu0 0.0
        %479 = vmatpush1.msra.mxu0 0.0
        %480 = vmatprep.subr.mxu0 0.0
        %481 = vmatpush1.msra.mxu0 0.0
        %482 = vmatprep.subr.mxu0 0.0
        %483 = vmatpush1.msra.mxu0 0.0
        %484 = vmatprep.subr.mxu0 0.0
        %485 = vmatpush1.msra.mxu0 0.0
        %486 = vmatprep.subr.mxu0 0.0
        %487 = vmatpush1.msra.mxu0 0.0
        %488 = vmatprep.subr.mxu0 0.0
        %489 = vmatpush1.msra.mxu0 0.0
        %490 = vmatprep.subr.mxu0 0.0
        %491 = vmatpush1.msra.mxu0 0.0
        %492 = vmatprep.mubr.f32.mxu0 0.0
        %493 = vmatmul.mubr.f32.gmra.mrb[0].mxu0 %v426
        %v494 = vpop.f32.mrb[0].mxu0
        %v495 = vadd.f32 %v350, %v494
        %v496 = vpop.f32.mrb[0].mxu0
        %v497 = vadd.f32 %v352, %v496
        %498 = vdwg.mxu0
        %499 = vmatprep.subr.mxu0 %v247
        %500 = vmatpush1.msra.mxu0 %v246
        %501 = vmatprep.subr.mxu0 0.0
        %502 = vmatpush1.msra.mxu0 0.0
        %503 = vmatprep.subr.mxu0 0.0
        %504 = vmatpush1.msra.mxu0 0.0
        %505 = vmatprep.subr.mxu0 0.0
        %506 = vmatpush1.msra.mxu0 0.0
        %507 = vmatprep.subr.mxu0 0.0
        %508 = vmatpush1.msra.mxu0 0.0
        %509 = vmatprep.subr.mxu0 0.0
        %510 = vmatpush1.msra.mxu0 0.0
        %511 = vmatprep.subr.mxu0 0.0
        %512 = vmatpush1.msra.mxu0 0.0
        %513 = vmatprep.subr.mxu0 0.0
        %514 = vmatpush1.msra.mxu0 0.0
        %515 = vmatprep.subr.mxu0 0.0
        %516 = vmatpush1.msra.mxu0 0.0
        %517 = vmatprep.subr.mxu0 0.0
        %518 = vmatpush1.msra.mxu0 0.0
        %519 = vmatprep.subr.mxu0 0.0
        %520 = vmatpush1.msra.mxu0 0.0
        %521 = vmatprep.subr.mxu0 0.0
        %522 = vmatpush1.msra.mxu0 0.0
        %523 = vmatprep.subr.mxu0 0.0
        %524 = vmatpush1.msra.mxu0 0.0
        %525 = vmatprep.subr.mxu0 0.0
        %526 = vmatpush1.msra.mxu0 0.0
        %527 = vmatprep.subr.mxu0 0.0
        %528 = vmatpush1.msra.mxu0 0.0
        %529 = vmatprep.subr.mxu0 0.0
        %530 = vmatpush1.msra.mxu0 0.0
        %531 = vmatprep.subr.mxu0 0.0
        %532 = vmatpush1.msra.mxu0 0.0
        %533 = vmatprep.subr.mxu0 0.0
        %534 = vmatpush1.msra.mxu0 0.0
        %535 = vmatprep.subr.mxu0 0.0
        %536 = vmatpush1.msra.mxu0 0.0
        %537 = vmatprep.subr.mxu0 0.0
        %538 = vmatpush1.msra.mxu0 0.0
        %539 = vmatprep.subr.mxu0 0.0
        %540 = vmatpush1.msra.mxu0 0.0
        %541 = vmatprep.subr.mxu0 0.0
        %542 = vmatpush1.msra.mxu0 0.0
        %543 = vmatprep.subr.mxu0 0.0
        %544 = vmatpush1.msra.mxu0 0.0
        %545 = vmatprep.subr.mxu0 0.0
        %546 = vmatpush1.msra.mxu0 0.0
        %547 = vmatprep.subr.mxu0 0.0
        %548 = vmatpush1.msra.mxu0 0.0
        %549 = vmatprep.subr.mxu0 0.0
        %550 = vmatpush1.msra.mxu0 0.0
        %551 = vmatprep.subr.mxu0 0.0
        %552 = vmatpush1.msra.mxu0 0.0
        %553 = vmatprep.subr.mxu0 0.0
        %554 = vmatpush1.msra.mxu0 0.0
        %555 = vmatprep.subr.mxu0 0.0
        %556 = vmatpush1.msra.mxu0 0.0
        %557 = vmatprep.subr.mxu0 0.0
        %558 = vmatpush1.msra.mxu0 0.0
        %559 = vmatprep.subr.mxu0 0.0
        %560 = vmatpush1.msra.mxu0 0.0
        %561 = vmatprep.subr.mxu0 0.0
        %562 = vmatpush1.msra.mxu0 0.0
        %563 = vmatprep.mubr.f32.mxu0 0.0
        %564 = vmatmul.mubr.f32.gmra.mrb[0].mxu0 %v426
        %v565 = vpop.f32.mrb[0].mxu0
        %v566 = vadd.f32 %v421, %v565
        %v567 = vpop.f32.mrb[0].mxu0
        %v568 = vadd.f32 %v423, %v567
        %569 = vdwg.mxu0
        %s570 = scalar_lea.vmem [#allocation4], 16
        %v571 = vld [vmem:[%s570] sm:$0xff]
        %v573 = vsel %vm279, %v571, 0
        %575 = vmatprep.subr.mxu0 %v273
        %576 = vmatpush1.msra.mxu0 %v274
        %577 = vmatprep.subr.mxu0 0.0
        %578 = vmatpush1.msra.mxu0 0.0
        %579 = vmatprep.subr.mxu0 0.0
        %580 = vmatpush1.msra.mxu0 0.0
        %581 = vmatprep.subr.mxu0 0.0
        %582 = vmatpush1.msra.mxu0 0.0
        %583 = vmatprep.subr.mxu0 0.0
        %584 = vmatpush1.msra.mxu0 0.0
        %585 = vmatprep.subr.mxu0 0.0
        %586 = vmatpush1.msra.mxu0 0.0
        %587 = vmatprep.subr.mxu0 0.0
        %588 = vmatpush1.msra.mxu0 0.0
        %589 = vmatprep.subr.mxu0 0.0
        %590 = vmatpush1.msra.mxu0 0.0
        %591 = vmatprep.subr.mxu0 0.0
        %592 = vmatpush1.msra.mxu0 0.0
        %593 = vmatprep.subr.mxu0 0.0
        %594 = vmatpush1.msra.mxu0 0.0
        %595 = vmatprep.subr.mxu0 0.0
        %596 = vmatpush1.msra.mxu0 0.0
        %597 = vmatprep.subr.mxu0 0.0
        %598 = vmatpush1.msra.mxu0 0.0
        %599 = vmatprep.subr.mxu0 0.0
        %600 = vmatpush1.msra.mxu0 0.0
        %601 = vmatprep.subr.mxu0 0.0
        %602 = vmatpush1.msra.mxu0 0.0
        %603 = vmatprep.subr.mxu0 0.0
        %604 = vmatpush1.msra.mxu0 0.0
        %605 = vmatprep.subr.mxu0 0.0
        %606 = vmatpush1.msra.mxu0 0.0
        %607 = vmatprep.subr.mxu0 0.0
        %608 = vmatpush1.msra.mxu0 0.0
        %609 = vmatprep.subr.mxu0 0.0
        %610 = vmatpush1.msra.mxu0 0.0
        %611 = vmatprep.subr.mxu0 0.0
        %612 = vmatpush1.msra.mxu0 0.0
        %613 = vmatprep.subr.mxu0 0.0
        %614 = vmatpush1.msra.mxu0 0.0
        %615 = vmatprep.subr.mxu0 0.0
        %616 = vmatpush1.msra.mxu0 0.0
        %617 = vmatprep.subr.mxu0 0.0
        %618 = vmatpush1.msra.mxu0 0.0
        %619 = vmatprep.subr.mxu0 0.0
        %620 = vmatpush1.msra.mxu0 0.0
        %621 = vmatprep.subr.mxu0 0.0
        %622 = vmatpush1.msra.mxu0 0.0
        %623 = vmatprep.subr.mxu0 0.0
        %624 = vmatpush1.msra.mxu0 0.0
        %625 = vmatprep.subr.mxu0 0.0
        %626 = vmatpush1.msra.mxu0 0.0
        %627 = vmatprep.subr.mxu0 0.0
        %628 = vmatpush1.msra.mxu0 0.0
        %629 = vmatprep.subr.mxu0 0.0
        %630 = vmatpush1.msra.mxu0 0.0
        %631 = vmatprep.subr.mxu0 0.0
        %632 = vmatpush1.msra.mxu0 0.0
        %633 = vmatprep.subr.mxu0 0.0
        %634 = vmatpush1.msra.mxu0 0.0
        %635 = vmatprep.subr.mxu0 0.0
        %636 = vmatpush1.msra.mxu0 0.0
        %637 = vmatprep.subr.mxu0 0.0
        %638 = vmatpush1.msra.mxu0 0.0
        %639 = vmatprep.mubr.f32.mxu0 0.0
        %640 = vmatmul.mubr.f32.gmra.mrb[0].mxu0 %v573
        %v641 = vpop.f32.mrb[0].mxu0
        %v642 = vadd.f32 0.0, %v641
        %v643 = vpop.f32.mrb[0].mxu0
        %v644 = vadd.f32 0.0, %v643
        %645 = vdwg.mxu0
        %646 = vmatprep.subr.mxu0 %v275
        %647 = vmatpush1.msra.mxu0 %v272
        %648 = vmatprep.subr.mxu0 0.0
        %649 = vmatpush1.msra.mxu0 0.0
        %650 = vmatprep.subr.mxu0 0.0
        %651 = vmatpush1.msra.mxu0 0.0
        %652 = vmatprep.subr.mxu0 0.0
        %653 = vmatpush1.msra.mxu0 0.0
        %654 = vmatprep.subr.mxu0 0.0
        %655 = vmatpush1.msra.mxu0 0.0
        %656 = vmatprep.subr.mxu0 0.0
        %657 = vmatpush1.msra.mxu0 0.0
        %658 = vmatprep.subr.mxu0 0.0
        %659 = vmatpush1.msra.mxu0 0.0
        %660 = vmatprep.subr.mxu0 0.0
        %661 = vmatpush1.msra.mxu0 0.0
        %662 = vmatprep.subr.mxu0 0.0
        %663 = vmatpush1.msra.mxu0 0.0
        %664 = vmatprep.subr.mxu0 0.0
        %665 = vmatpush1.msra.mxu0 0.0
        %666 = vmatprep.subr.mxu0 0.0
        %667 = vmatpush1.msra.mxu0 0.0
        %668 = vmatprep.subr.mxu0 0.0
        %669 = vmatpush1.msra.mxu0 0.0
        %670 = vmatprep.subr.mxu0 0.0
        %671 = vmatpush1.msra.mxu0 0.0
        %672 = vmatprep.subr.mxu0 0.0
        %673 = vmatpush1.msra.mxu0 0.0
        %674 = vmatprep.subr.mxu0 0.0
        %675 = vmatpush1.msra.mxu0 0.0
        %676 = vmatprep.subr.mxu0 0.0
        %677 = vmatpush1.msra.mxu0 0.0
        %678 = vmatprep.subr.mxu0 0.0
        %679 = vmatpush1.msra.mxu0 0.0
        %680 = vmatprep.subr.mxu0 0.0
        %681 = vmatpush1.msra.mxu0 0.0
        %682 = vmatprep.subr.mxu0 0.0
        %683 = vmatpush1.msra.mxu0 0.0
        %684 = vmatprep.subr.mxu0 0.0
        %685 = vmatpush1.msra.mxu0 0.0
        %686 = vmatprep.subr.mxu0 0.0
        %687 = vmatpush1.msra.mxu0 0.0
        %688 = vmatprep.subr.mxu0 0.0
        %689 = vmatpush1.msra.mxu0 0.0
        %690 = vmatprep.subr.mxu0 0.0
        %691 = vmatpush1.msra.mxu0 0.0
        %692 = vmatprep.subr.mxu0 0.0
        %693 = vmatpush1.msra.mxu0 0.0
        %694 = vmatprep.subr.mxu0 0.0
        %695 = vmatpush1.msra.mxu0 0.0
        %696 = vmatprep.subr.mxu0 0.0
        %697 = vmatpush1.msra.mxu0 0.0
        %698 = vmatprep.subr.mxu0 0.0
        %699 = vmatpush1.msra.mxu0 0.0
        %700 = vmatprep.subr.mxu0 0.0
        %701 = vmatpush1.msra.mxu0 0.0
        %702 = vmatprep.subr.mxu0 0.0
        %703 = vmatpush1.msra.mxu0 0.0
        %704 = vmatprep.subr.mxu0 0.0
        %705 = vmatpush1.msra.mxu0 0.0
        %706 = vmatprep.subr.mxu0 0.0
        %707 = vmatpush1.msra.mxu0 0.0
        %708 = vmatprep.subr.mxu0 0.0
        %709 = vmatpush1.msra.mxu0 0.0
        %710 = vmatprep.mubr.f32.mxu0 0.0
        %711 = vmatmul.mubr.f32.gmra.mrb[0].mxu0 %v573
        %v712 = vpop.f32.mrb[0].mxu0
        %v713 = vadd.f32 0.0, %v712
        %v714 = vpop.f32.mrb[0].mxu0
        %v715 = vadd.f32 0.0, %v714
        %716 = vdwg.mxu0
        %v717 = vadd.f32 %v495, %v642
        %v718 = vadd.f32 %v497, %v644
        %v719 = vadd.f32 %v566, %v713
        %v720 = vadd.f32 %v568, %v715
        %v721 = vmax.f32 %v717, 0.0
        %v722 = vmax.f32 %v718, 0.0
        %v723 = vmax.f32 %v719, 0.0
        %v724 = vmax.f32 %v720, 0.0
        %s725 = ssub.s32 %s222, 1
        %v726 = vadd.s32 %v257, 128
        %v727 = vadd.s32 %v257, 256
        %v728 = vadd.s32 %v257, 384
        %v729 = vstv %s725
        %v730 = vadd.s32 %v729, %v257
        %v731 = vadd.s32 %v729, %v726
        %v732 = vadd.s32 %v729, %v727
        %v733 = vadd.s32 %v729, %v728
        %vm734 = vcmp.ge.s32.totalorder %v730, 0
        %vm735 = vcmp.ge.s32.totalorder %v731, 0
        %vm736 = vcmp.ge.s32.totalorder %v732, 0
        %vm737 = vcmp.ge.s32.totalorder %v733, 0
        %vm738 = vcmp.lt.s32.totalorder %v730, 300
        %vm739 = vcmp.lt.s32.totalorder %v731, 300
        %vm740 = vcmp.lt.s32.totalorder %v732, 300
        %vm741 = vcmp.lt.s32.totalorder %v733, 300
        %vm742 = vmand %vm734, %vm738
        %vm743 = vmand %vm735, %vm739
        %vm744 = vmand %vm736, %vm740
        %vm745 = vmand %vm737, %vm741
        %v746 = vsel %vm742, %v721, 0.0
        %v747 = vsel %vm743, %v722, 0.0
        %v748 = vsel %vm744, %v723, 0.0
        %v749 = vsel %vm745, %v724, 0.0
        %750 = vrot.lane.b32.xlu0 %v746, 127
        %v751 = vpop.permute.xlu0 %750
        %752 = vrot.lane.b32.xlu0 %v747, 127
        %v753 = vpop.permute.xlu0 %752
        %754 = vrot.lane.b32.xlu0 %v748, 127
        %v755 = vpop.permute.xlu0 %754
        %756 = vrot.lane.b32.xlu0 %v749, 127
        %v757 = vpop.permute.xlu0 %756
        %v758 = vsel %vm258, %v755, %v757
        %v759 = vsel %vm258, %v753, %v755
        %v760 = vsel %vm258, %v751, %v753
        %v761 = vsel %vm258, %v757, %v751
        %762 = vrot.lane.b32.xlu0 %v746, 126
        %v763 = vpop.permute.xlu0 %762
        %764 = vrot.lane.b32.xlu0 %v747, 126
        %v765 = vpop.permute.xlu0 %764
        %766 = vrot.lane.b32.xlu0 %v748, 126
        %v767 = vpop.permute.xlu0 %766
        %768 = vrot.lane.b32.xlu0 %v749, 126
        %v769 = vpop.permute.xlu0 %768
        %v770 = vsel %vm271, %v767, %v769
        %v771 = vsel %vm271, %v765, %v767
        %v772 = vsel %vm271, %v763, %v765
        %v773 = vsel %vm271, %v769, %v763
        %v774 = vld [vmem:[#allocation7] sm:$0xff]
        %s775 = scalar_lea.vmem [#allocation7], 8
        %v776 = vld [vmem:[%s775] sm:$0xff]
        %v778 = vsel %vm279, %v776, 0
        %780 = vmatprep.subr.mxu0 %v759
        %781 = vmatpush1.msra.mxu0 %v760
        %782 = vmatprep.subr.mxu0 0.0
        %783 = vmatpush1.msra.mxu0 0.0
        %784 = vmatprep.subr.mxu0 0.0
        %785 = vmatpush1.msra.mxu0 0.0
        %786 = vmatprep.subr.mxu0 0.0
        %787 = vmatpush1.msra.mxu0 0.0
        %788 = vmatprep.subr.mxu0 0.0
        %789 = vmatpush1.msra.mxu0 0.0
        %790 = vmatprep.subr.mxu0 0.0
        %791 = vmatpush1.msra.mxu0 0.0
        %792 = vmatprep.subr.mxu0 0.0
        %793 = vmatpush1.msra.mxu0 0.0
        %794 = vmatprep.subr.mxu0 0.0
        %795 = vmatpush1.msra.mxu0 0.0
        %796 = vmatprep.subr.mxu0 0.0
        %797 = vmatpush1.msra.mxu0 0.0
        %798 = vmatprep.subr.mxu0 0.0
        %799 = vmatpush1.msra.mxu0 0.0
        %800 = vmatprep.subr.mxu0 0.0
        %801 = vmatpush1.msra.mxu0 0.0
        %802 = vmatprep.subr.mxu0 0.0
        %803 = vmatpush1.msra.mxu0 0.0
        %804 = vmatprep.subr.mxu0 0.0
        %805 = vmatpush1.msra.mxu0 0.0
        %806 = vmatprep.subr.mxu0 0.0
        %807 = vmatpush1.msra.mxu0 0.0
        %808 = vmatprep.subr.mxu0 0.0
        %809 = vmatpush1.msra.mxu0 0.0
        %810 = vmatprep.subr.mxu0 0.0
        %811 = vmatpush1.msra.mxu0 0.0
        %812 = vmatprep.subr.mxu0 0.0
        %813 = vmatpush1.msra.mxu0 0.0
        %814 = vmatprep.subr.mxu0 0.0
        %815 = vmatpush1.msra.mxu0 0.0
        %816 = vmatprep.subr.mxu0 0.0
        %817 = vmatpush1.msra.mxu0 0.0
        %818 = vmatprep.subr.mxu0 0.0
        %819 = vmatpush1.msra.mxu0 0.0
        %820 = vmatprep.subr.mxu0 0.0
        %821 = vmatpush1.msra.mxu0 0.0
        %822 = vmatprep.subr.mxu0 0.0
        %823 = vmatpush1.msra.mxu0 0.0
        %824 = vmatprep.subr.mxu0 0.0
        %825 = vmatpush1.msra.mxu0 0.0
        %826 = vmatprep.subr.mxu0 0.0
        %827 = vmatpush1.msra.mxu0 0.0
        %828 = vmatprep.subr.mxu0 0.0
        %829 = vmatpush1.msra.mxu0 0.0
        %830 = vmatprep.subr.mxu0 0.0
        %831 = vmatpush1.msra.mxu0 0.0
        %832 = vmatprep.subr.mxu0 0.0
        %833 = vmatpush1.msra.mxu0 0.0
        %834 = vmatprep.subr.mxu0 0.0
        %835 = vmatpush1.msra.mxu0 0.0
        %836 = vmatprep.subr.mxu0 0.0
        %837 = vmatpush1.msra.mxu0 0.0
        %838 = vmatprep.subr.mxu0 0.0
        %839 = vmatpush1.msra.mxu0 0.0
        %840 = vmatprep.subr.mxu0 0.0
        %841 = vmatpush1.msra.mxu0 0.0
        %842 = vmatprep.subr.mxu0 0.0
        %843 = vmatpush1.msra.mxu0 0.0
        %844 = vmatprep.mubr.f32.mxu0 0.0
        %845 = vmatmul.mubr.f32.gmra.mrb[0].mxu0 %v778
        %v846 = vpop.f32.mrb[0].mxu0
        %v847 = vadd.f32 0.0, %v846
        %v848 = vpop.f32.mrb[0].mxu0
        %v849 = vadd.f32 0.0, %v848
        %850 = vdwg.mxu0
        %851 = vmatprep.subr.mxu0 %v761
        %852 = vmatpush1.msra.mxu0 %v758
        %853 = vmatprep.subr.mxu0 0.0
        %854 = vmatpush1.msra.mxu0 0.0
        %855 = vmatprep.subr.mxu0 0.0
        %856 = vmatpush1.msra.mxu0 0.0
        %857 = vmatprep.subr.mxu0 0.0
        %858 = vmatpush1.msra.mxu0 0.0
        %859 = vmatprep.subr.mxu0 0.0
        %860 = vmatpush1.msra.mxu0 0.0
        %861 = vmatprep.subr.mxu0 0.0
        %862 = vmatpush1.msra.mxu0 0.0
        %863 = vmatprep.subr.mxu0 0.0
        %864 = vmatpush1.msra.mxu0 0.0
        %865 = vmatprep.subr.mxu0 0.0
        %866 = vmatpush1.msra.mxu0 0.0
        %867 = vmatprep.subr.mxu0 0.0
        %868 = vmatpush1.msra.mxu0 0.0
        %869 = vmatprep.subr.mxu0 0.0
        %870 = vmatpush1.msra.mxu0 0.0
        %871 = vmatprep.subr.mxu0 0.0
        %872 = vmatpush1.msra.mxu0 0.0
        %873 = vmatprep.subr.mxu0 0.0
        %874 = vmatpush1.msra.mxu0 0.0
        %875 = vmatprep.subr.mxu0 0.0
        %876 = vmatpush1.msra.mxu0 0.0
        %877 = vmatprep.subr.mxu0 0.0
        %878 = vmatpush1.msra.mxu0 0.0
        %879 = vmatprep.subr.mxu0 0.0
        %880 = vmatpush1.msra.mxu0 0.0
        %881 = vmatprep.subr.mxu0 0.0
        %882 = vmatpush1.msra.mxu0 0.0
        %883 = vmatprep.subr.mxu0 0.0
        %884 = vmatpush1.msra.mxu0 0.0
        %885 = vmatprep.subr.mxu0 0.0
        %886 = vmatpush1.msra.mxu0 0.0
        %887 = vmatprep.subr.mxu0 0.0
        %888 = vmatpush1.msra.mxu0 0.0
        %889 = vmatprep.subr.mxu0 0.0
        %890 = vmatpush1.msra.mxu0 0.0
        %891 = vmatprep.subr.mxu0 0.0
        %892 = vmatpush1.msra.mxu0 0.0
        %893 = vmatprep.subr.mxu0 0.0
        %894 = vmatpush1.msra.mxu0 0.0
        %895 = vmatprep.subr.mxu0 0.0
        %896 = vmatpush1.msra.mxu0 0.0
        %897 = vmatprep.subr.mxu0 0.0
        %898 = vmatpush1.msra.mxu0 0.0
        %899 = vmatprep.subr.mxu0 0.0
        %900 = vmatpush1.msra.mxu0 0.0
        %901 = vmatprep.subr.mxu0 0.0
        %902 = vmatpush1.msra.mxu0 0.0
        %903 = vmatprep.subr.mxu0 0.0
        %904 = vmatpush1.msra.mxu0 0.0
        %905 = vmatprep.subr.mxu0 0.0
        %906 = vmatpush1.msra.mxu0 0.0
        %907 = vmatprep.subr.mxu0 0.0
        %908 = vmatpush1.msra.mxu0 0.0
        %909 = vmatprep.subr.mxu0 0.0
        %910 = vmatpush1.msra.mxu0 0.0
        %911 = vmatprep.subr.mxu0 0.0
        %912 = vmatpush1.msra.mxu0 0.0
        %913 = vmatprep.subr.mxu0 0.0
        %914 = vmatpush1.msra.mxu0 0.0
        %915 = vmatprep.mubr.f32.mxu0 0.0
        %916 = vmatmul.mubr.f32.gmra.mrb[0].mxu0 %v778
        %v917 = vpop.f32.mrb[0].mxu0
        %v918 = vadd.f32 0.0, %v917
        %v919 = vpop.f32.mrb[0].mxu0
        %920 = vdwg.mxu0
        %v922 = vsel %vm279, %v774, 0
        %924 = vmatprep.subr.mxu0 %v747
        %925 = vmatpush1.msra.mxu0 %v746
        %926 = vmatprep.subr.mxu0 0.0
        %927 = vmatpush1.msra.mxu0 0.0
        %928 = vmatprep.subr.mxu0 0.0
        %929 = vmatpush1.msra.mxu0 0.0
        %930 = vmatprep.subr.mxu0 0.0
        %931 = vmatpush1.msra.mxu0 0.0
        %932 = vmatprep.subr.mxu0 0.0
        %933 = vmatpush1.msra.mxu0 0.0
        %934 = vmatprep.subr.mxu0 0.0
        %935 = vmatpush1.msra.mxu0 0.0
        %936 = vmatprep.subr.mxu0 0.0
        %937 = vmatpush1.msra.mxu0 0.0
        %938 = vmatprep.subr.mxu0 0.0
        %939 = vmatpush1.msra.mxu0 0.0
        %940 = vmatprep.subr.mxu0 0.0
        %941 = vmatpush1.msra.mxu0 0.0
        %942 = vmatprep.subr.mxu0 0.0
        %943 = vmatpush1.msra.mxu0 0.0
        %944 = vmatprep.subr.mxu0 0.0
        %945 = vmatpush1.msra.mxu0 0.0
        %946 = vmatprep.subr.mxu0 0.0
        %947 = vmatpush1.msra.mxu0 0.0
        %948 = vmatprep.subr.mxu0 0.0
        %949 = vmatpush1.msra.mxu0 0.0
        %950 = vmatprep.subr.mxu0 0.0
        %951 = vmatpush1.msra.mxu0 0.0
        %952 = vmatprep.subr.mxu0 0.0
        %953 = vmatpush1.msra.mxu0 0.0
        %954 = vmatprep.subr.mxu0 0.0
        %955 = vmatpush1.msra.mxu0 0.0
        %956 = vmatprep.subr.mxu0 0.0
        %957 = vmatpush1.msra.mxu0 0.0
        %958 = vmatprep.subr.mxu0 0.0
        %959 = vmatpush1.msra.mxu0 0.0
        %960 = vmatprep.subr.mxu0 0.0
        %961 = vmatpush1.msra.mxu0 0.0
        %962 = vmatprep.subr.mxu0 0.0
        %963 = vmatpush1.msra.mxu0 0.0
        %964 = vmatprep.subr.mxu0 0.0
        %965 = vmatpush1.msra.mxu0 0.0
        %966 = vmatprep.subr.mxu0 0.0
        %967 = vmatpush1.msra.mxu0 0.0
        %968 = vmatprep.subr.mxu0 0.0
        %969 = vmatpush1.msra.mxu0 0.0
        %970 = vmatprep.subr.mxu0 0.0
        %971 = vmatpush1.msra.mxu0 0.0
        %972 = vmatprep.subr.mxu0 0.0
        %973 = vmatpush1.msra.mxu0 0.0
        %974 = vmatprep.subr.mxu0 0.0
        %975 = vmatpush1.msra.mxu0 0.0
        %976 = vmatprep.subr.mxu0 0.0
        %977 = vmatpush1.msra.mxu0 0.0
        %978 = vmatprep.subr.mxu0 0.0
        %979 = vmatpush1.msra.mxu0 0.0
        %980 = vmatprep.subr.mxu0 0.0
        %981 = vmatpush1.msra.mxu0 0.0
        %982 = vmatprep.subr.mxu0 0.0
        %983 = vmatpush1.msra.mxu0 0.0
        %984 = vmatprep.subr.mxu0 0.0
        %985 = vmatpush1.msra.mxu0 0.0
        %986 = vmatprep.subr.mxu0 0.0
        %987 = vmatpush1.msra.mxu0 0.0
        %988 = vmatprep.mubr.f32.mxu0 0.0
        %989 = vmatmul.mubr.f32.gmra.mrb[0].mxu0 %v922
        %v990 = vpop.f32.mrb[0].mxu0
        %v991 = vadd.f32 %v847, %v990
        %v992 = vpop.f32.mrb[0].mxu0
        %v993 = vadd.f32 %v849, %v992
        %994 = vdwg.mxu0
        %995 = vmatprep.subr.mxu0 %v749
        %996 = vmatpush1.msra.mxu0 %v748
        %997 = vmatprep.subr.mxu0 0.0
        %998 = vmatpush1.msra.mxu0 0.0
        %999 = vmatprep.subr.mxu0 0.0
        %1000 = vmatpush1.msra.mxu0 0.0
        %1001 = vmatprep.subr.mxu0 0.0
        %1002 = vmatpush1.msra.mxu0 0.0
        %1003 = vmatprep.subr.mxu0 0.0
        %1004 = vmatpush1.msra.mxu0 0.0
        %1005 = vmatprep.subr.mxu0 0.0
        %1006 = vmatpush1.msra.mxu0 0.0
        %1007 = vmatprep.subr.mxu0 0.0
        %1008 = vmatpush1.msra.mxu0 0.0
        %1009 = vmatprep.subr.mxu0 0.0
        %1010 = vmatpush1.msra.mxu0 0.0
        %1011 = vmatprep.subr.mxu0 0.0
        %1012 = vmatpush1.msra.mxu0 0.0
        %1013 = vmatprep.subr.mxu0 0.0
        %1014 = vmatpush1.msra.mxu0 0.0
        %1015 = vmatprep.subr.mxu0 0.0
        %1016 = vmatpush1.msra.mxu0 0.0
        %1017 = vmatprep.subr.mxu0 0.0
        %1018 = vmatpush1.msra.mxu0 0.0
        %1019 = vmatprep.subr.mxu0 0.0
        %1020 = vmatpush1.msra.mxu0 0.0
        %1021 = vmatprep.subr.mxu0 0.0
        %1022 = vmatpush1.msra.mxu0 0.0
        %1023 = vmatprep.subr.mxu0 0.0
        %1024 = vmatpush1.msra.mxu0 0.0
        %1025 = vmatprep.subr.mxu0 0.0
        %1026 = vmatpush1.msra.mxu0 0.0
        %1027 = vmatprep.subr.mxu0 0.0
        %1028 = vmatpush1.msra.mxu0 0.0
        %1029 = vmatprep.subr.mxu0 0.0
        %1030 = vmatpush1.msra.mxu0 0.0
        %1031 = vmatprep.subr.mxu0 0.0
        %1032 = vmatpush1.msra.mxu0 0.0
        %1033 = vmatprep.subr.mxu0 0.0
        %1034 = vmatpush1.msra.mxu0 0.0
        %1035 = vmatprep.subr.mxu0 0.0
        %1036 = vmatpush1.msra.mxu0 0.0
        %1037 = vmatprep.subr.mxu0 0.0
        %1038 = vmatpush1.msra.mxu0 0.0
        %1039 = vmatprep.subr.mxu0 0.0
        %1040 = vmatpush1.msra.mxu0 0.0
        %1041 = vmatprep.subr.mxu0 0.0
        %1042 = vmatpush1.msra.mxu0 0.0
        %1043 = vmatprep.subr.mxu0 0.0
        %1044 = vmatpush1.msra.mxu0 0.0
        %1045 = vmatprep.subr.mxu0 0.0
        %1046 = vmatpush1.msra.mxu0 0.0
        %1047 = vmatprep.subr.mxu0 0.0
        %1048 = vmatpush1.msra.mxu0 0.0
        %1049 = vmatprep.subr.mxu0 0.0
        %1050 = vmatpush1.msra.mxu0 0.0
        %1051 = vmatprep.subr.mxu0 0.0
        %1052 = vmatpush1.msra.mxu0 0.0
        %1053 = vmatprep.subr.mxu0 0.0
        %1054 = vmatpush1.msra.mxu0 0.0
        %1055 = vmatprep.subr.mxu0 0.0
        %1056 = vmatpush1.msra.mxu0 0.0
        %1057 = vmatprep.subr.mxu0 0.0
        %1058 = vmatpush1.msra.mxu0 0.0
        %1059 = vmatprep.mubr.f32.mxu0 0.0
        %1060 = vmatmul.mubr.f32.gmra.mrb[0].mxu0 %v922
        %v1061 = vpop.f32.mrb[0].mxu0
        %v1062 = vadd.f32 %v918, %v1061
        %v1063 = vpop.f32.mrb[0].mxu0
        %1064 = vdwg.mxu0
        %s1065 = scalar_lea.vmem [#allocation7], 16
        %v1066 = vld [vmem:[%s1065] sm:$0xff]
        %v1068 = vsel %vm279, %v1066, 0
        %1070 = vmatprep.subr.mxu0 %v771
        %1071 = vmatpush1.msra.mxu0 %v772
        %1072 = vmatprep.subr.mxu0 0.0
        %1073 = vmatpush1.msra.mxu0 0.0
        %1074 = vmatprep.subr.mxu0 0.0
        %1075 = vmatpush1.msra.mxu0 0.0
        %1076 = vmatprep.subr.mxu0 0.0
        %1077 = vmatpush1.msra.mxu0 0.0
        %1078 = vmatprep.subr.mxu0 0.0
        %1079 = vmatpush1.msra.mxu0 0.0
        %1080 = vmatprep.subr.mxu0 0.0
        %1081 = vmatpush1.msra.mxu0 0.0
        %1082 = vmatprep.subr.mxu0 0.0
        %1083 = vmatpush1.msra.mxu0 0.0
        %1084 = vmatprep.subr.mxu0 0.0
        %1085 = vmatpush1.msra.mxu0 0.0
        %1086 = vmatprep.subr.mxu0 0.0
        %1087 = vmatpush1.msra.mxu0 0.0
        %1088 = vmatprep.subr.mxu0 0.0
        %1089 = vmatpush1.msra.mxu0 0.0
        %1090 = vmatprep.subr.mxu0 0.0
        %1091 = vmatpush1.msra.mxu0 0.0
        %1092 = vmatprep.subr.mxu0 0.0
        %1093 = vmatpush1.msra.mxu0 0.0
        %1094 = vmatprep.subr.mxu0 0.0
        %1095 = vmatpush1.msra.mxu0 0.0
        %1096 = vmatprep.subr.mxu0 0.0
        %1097 = vmatpush1.msra.mxu0 0.0
        %1098 = vmatprep.subr.mxu0 0.0
        %1099 = vmatpush1.msra.mxu0 0.0
        %1100 = vmatprep.subr.mxu0 0.0
        %1101 = vmatpush1.msra.mxu0 0.0
        %1102 = vmatprep.subr.mxu0 0.0
        %1103 = vmatpush1.msra.mxu0 0.0
        %1104 = vmatprep.subr.mxu0 0.0
        %1105 = vmatpush1.msra.mxu0 0.0
        %1106 = vmatprep.subr.mxu0 0.0
        %1107 = vmatpush1.msra.mxu0 0.0
        %1108 = vmatprep.subr.mxu0 0.0
        %1109 = vmatpush1.msra.mxu0 0.0
        %1110 = vmatprep.subr.mxu0 0.0
        %1111 = vmatpush1.msra.mxu0 0.0
        %1112 = vmatprep.subr.mxu0 0.0
        %1113 = vmatpush1.msra.mxu0 0.0
        %1114 = vmatprep.subr.mxu0 0.0
        %1115 = vmatpush1.msra.mxu0 0.0
        %1116 = vmatprep.subr.mxu0 0.0
        %1117 = vmatpush1.msra.mxu0 0.0
        %1118 = vmatprep.subr.mxu0 0.0
        %1119 = vmatpush1.msra.mxu0 0.0
        %1120 = vmatprep.subr.mxu0 0.0
        %1121 = vmatpush1.msra.mxu0 0.0
        %1122 = vmatprep.subr.mxu0 0.0
        %1123 = vmatpush1.msra.mxu0 0.0
        %1124 = vmatprep.subr.mxu0 0.0
        %1125 = vmatpush1.msra.mxu0 0.0
        %1126 = vmatprep.subr.mxu0 0.0
        %1127 = vmatpush1.msra.mxu0 0.0
        %1128 = vmatprep.subr.mxu0 0.0
        %1129 = vmatpush1.msra.mxu0 0.0
        %1130 = vmatprep.subr.mxu0 0.0
        %1131 = vmatpush1.msra.mxu0 0.0
        %1132 = vmatprep.subr.mxu0 0.0
        %1133 = vmatpush1.msra.mxu0 0.0
        %1134 = vmatprep.mubr.f32.mxu0 0.0
        %1135 = vmatmul.mubr.f32.gmra.mrb[0].mxu0 %v1068
        %v1136 = vpop.f32.mrb[0].mxu0
        %v1137 = vadd.f32 0.0, %v1136
        %v1138 = vpop.f32.mrb[0].mxu0
        %v1139 = vadd.f32 0.0, %v1138
        %1140 = vdwg.mxu0
        %1141 = vmatprep.subr.mxu0 %v773
        %1142 = vmatpush1.msra.mxu0 %v770
        %1143 = vmatprep.subr.mxu0 0.0
        %1144 = vmatpush1.msra.mxu0 0.0
        %1145 = vmatprep.subr.mxu0 0.0
        %1146 = vmatpush1.msra.mxu0 0.0
        %1147 = vmatprep.subr.mxu0 0.0
        %1148 = vmatpush1.msra.mxu0 0.0
        %1149 = vmatprep.subr.mxu0 0.0
        %1150 = vmatpush1.msra.mxu0 0.0
        %1151 = vmatprep.subr.mxu0 0.0
        %1152 = vmatpush1.msra.mxu0 0.0
        %1153 = vmatprep.subr.mxu0 0.0
        %1154 = vmatpush1.msra.mxu0 0.0
        %1155 = vmatprep.subr.mxu0 0.0
        %1156 = vmatpush1.msra.mxu0 0.0
        %1157 = vmatprep.subr.mxu0 0.0
        %1158 = vmatpush1.msra.mxu0 0.0
        %1159 = vmatprep.subr.mxu0 0.0
        %1160 = vmatpush1.msra.mxu0 0.0
        %1161 = vmatprep.subr.mxu0 0.0
        %1162 = vmatpush1.msra.mxu0 0.0
        %1163 = vmatprep.subr.mxu0 0.0
        %1164 = vmatpush1.msra.mxu0 0.0
        %1165 = vmatprep.subr.mxu0 0.0
        %1166 = vmatpush1.msra.mxu0 0.0
        %1167 = vmatprep.subr.mxu0 0.0
        %1168 = vmatpush1.msra.mxu0 0.0
        %1169 = vmatprep.subr.mxu0 0.0
        %1170 = vmatpush1.msra.mxu0 0.0
        %1171 = vmatprep.subr.mxu0 0.0
        %1172 = vmatpush1.msra.mxu0 0.0
        %1173 = vmatprep.subr.mxu0 0.0
        %1174 = vmatpush1.msra.mxu0 0.0
        %1175 = vmatprep.subr.mxu0 0.0
        %1176 = vmatpush1.msra.mxu0 0.0
        %1177 = vmatprep.subr.mxu0 0.0
        %1178 = vmatpush1.msra.mxu0 0.0
        %1179 = vmatprep.subr.mxu0 0.0
        %1180 = vmatpush1.msra.mxu0 0.0
        %1181 = vmatprep.subr.mxu0 0.0
        %1182 = vmatpush1.msra.mxu0 0.0
        %1183 = vmatprep.subr.mxu0 0.0
        %1184 = vmatpush1.msra.mxu0 0.0
        %1185 = vmatprep.subr.mxu0 0.0
        %1186 = vmatpush1.msra.mxu0 0.0
        %1187 = vmatprep.subr.mxu0 0.0
        %1188 = vmatpush1.msra.mxu0 0.0
        %1189 = vmatprep.subr.mxu0 0.0
        %1190 = vmatpush1.msra.mxu0 0.0
        %1191 = vmatprep.subr.mxu0 0.0
        %1192 = vmatpush1.msra.mxu0 0.0
        %1193 = vmatprep.subr.mxu0 0.0
        %1194 = vmatpush1.msra.mxu0 0.0
        %1195 = vmatprep.subr.mxu0 0.0
        %1196 = vmatpush1.msra.mxu0 0.0
        %1197 = vmatprep.subr.mxu0 0.0
        %1198 = vmatpush1.msra.mxu0 0.0
        %1199 = vmatprep.subr.mxu0 0.0
        %1200 = vmatpush1.msra.mxu0 0.0
        %1201 = vmatprep.subr.mxu0 0.0
        %1202 = vmatpush1.msra.mxu0 0.0
        %1203 = vmatprep.subr.mxu0 0.0
        %1204 = vmatpush1.msra.mxu0 0.0
        %1205 = vmatprep.mubr.f32.mxu0 0.0
        %1206 = vmatmul.mubr.f32.gmra.mrb[0].mxu0 %v1068
        %v1207 = vpop.f32.mrb[0].mxu0
        %v1208 = vadd.f32 0.0, %v1207
        %v1209 = vpop.f32.mrb[0].mxu0
        %1210 = vdwg.mxu0
        %v1211 = vadd.f32 %v991, %v1137
        %v1212 = vadd.f32 %v993, %v1139
        %v1213 = vadd.f32 %v1062, %v1208
        %v1214 = vld [vmem:[%s3] sm:$0xff]
        %v1215 = vld [vmem:[%s4] sm:$0xff]
        %1217 = vset.pattern.permute.xlu0 0
        %1218 = vperm.xlu0 %1217, %v1215
        %v1219 = vpop.permute.xlu0 %1218
        %v1222 = vsel %vm279, %v1214, 0
        %1224 = vmatprep.subr.mxu0 %v273
        %1225 = vmatpush1.msra.mxu0 %v274
        %1226 = vmatprep.subr.mxu0 0.0
        %1227 = vmatpush1.msra.mxu0 0.0
        %1228 = vmatprep.subr.mxu0 0.0
        %1229 = vmatpush1.msra.mxu0 0.0
        %1230 = vmatprep.subr.mxu0 0.0
        %1231 = vmatpush1.msra.mxu0 0.0
        %1232 = vmatprep.subr.mxu0 0.0
        %1233 = vmatpush1.msra.mxu0 0.0
        %1234 = vmatprep.subr.mxu0 0.0
        %1235 = vmatpush1.msra.mxu0 0.0
        %1236 = vmatprep.subr.mxu0 0.0
        %1237 = vmatpush1.msra.mxu0 0.0
        %1238 = vmatprep.subr.mxu0 0.0
        %1239 = vmatpush1.msra.mxu0 0.0
        %1240 = vmatprep.subr.mxu0 0.0
        %1241 = vmatpush1.msra.mxu0 0.0
        %1242 = vmatprep.subr.mxu0 0.0
        %1243 = vmatpush1.msra.mxu0 0.0
        %1244 = vmatprep.subr.mxu0 0.0
        %1245 = vmatpush1.msra.mxu0 0.0
        %1246 = vmatprep.subr.mxu0 0.0
        %1247 = vmatpush1.msra.mxu0 0.0
        %1248 = vmatprep.subr.mxu0 0.0
        %1249 = vmatpush1.msra.mxu0 0.0
        %1250 = vmatprep.subr.mxu0 0.0
        %1251 = vmatpush1.msra.mxu0 0.0
        %1252 = vmatprep.subr.mxu0 0.0
        %1253 = vmatpush1.msra.mxu0 0.0
        %1254 = vmatprep.subr.mxu0 0.0
        %1255 = vmatpush1.msra.mxu0 0.0
        %1256 = vmatprep.subr.mxu0 0.0
        %1257 = vmatpush1.msra.mxu0 0.0
        %1258 = vmatprep.subr.mxu0 0.0
        %1259 = vmatpush1.msra.mxu0 0.0
        %1260 = vmatprep.subr.mxu0 0.0
        %1261 = vmatpush1.msra.mxu0 0.0
        %1262 = vmatprep.subr.mxu0 0.0
        %1263 = vmatpush1.msra.mxu0 0.0
        %1264 = vmatprep.subr.mxu0 0.0
        %1265 = vmatpush1.msra.mxu0 0.0
        %1266 = vmatprep.subr.mxu0 0.0
        %1267 = vmatpush1.msra.mxu0 0.0
        %1268 = vmatprep.subr.mxu0 0.0
        %1269 = vmatpush1.msra.mxu0 0.0
        %1270 = vmatprep.subr.mxu0 0.0
        %1271 = vmatpush1.msra.mxu0 0.0
        %1272 = vmatprep.subr.mxu0 0.0
        %1273 = vmatpush1.msra.mxu0 0.0
        %1274 = vmatprep.subr.mxu0 0.0
        %1275 = vmatpush1.msra.mxu0 0.0
        %1276 = vmatprep.subr.mxu0 0.0
        %1277 = vmatpush1.msra.mxu0 0.0
        %1278 = vmatprep.subr.mxu0 0.0
        %1279 = vmatpush1.msra.mxu0 0.0
        %1280 = vmatprep.subr.mxu0 0.0
        %1281 = vmatpush1.msra.mxu0 0.0
        %1282 = vmatprep.subr.mxu0 0.0
        %1283 = vmatpush1.msra.mxu0 0.0
        %1284 = vmatprep.subr.mxu0 0.0
        %1285 = vmatpush1.msra.mxu0 0.0
        %1286 = vmatprep.subr.mxu0 0.0
        %1287 = vmatpush1.msra.mxu0 0.0
        %1288 = vmatprep.mubr.f32.mxu0 0.0
        %1289 = vmatmul.mubr.f32.gmra.mrb[0].mxu0 %v1222
        %v1290 = vpop.f32.mrb[0].mxu0
        %v1291 = vadd.f32 %v1219, %v1290
        %v1292 = vpop.f32.mrb[0].mxu0
        %v1293 = vadd.f32 %v1219, %v1292
        %1294 = vdwg.mxu0
        %1295 = vmatprep.subr.mxu0 0.0
        %1296 = vmatpush1.msra.mxu0 %v272
        %1297 = vmatprep.subr.mxu0 0.0
        %1298 = vmatpush1.msra.mxu0 0.0
        %1299 = vmatprep.subr.mxu0 0.0
        %1300 = vmatpush1.msra.mxu0 0.0
        %1301 = vmatprep.subr.mxu0 0.0
        %1302 = vmatpush1.msra.mxu0 0.0
        %1303 = vmatprep.subr.mxu0 0.0
        %1304 = vmatpush1.msra.mxu0 0.0
        %1305 = vmatprep.subr.mxu0 0.0
        %1306 = vmatpush1.msra.mxu0 0.0
        %1307 = vmatprep.subr.mxu0 0.0
        %1308 = vmatpush1.msra.mxu0 0.0
        %1309 = vmatprep.subr.mxu0 0.0
        %1310 = vmatpush1.msra.mxu0 0.0
        %1311 = vmatprep.subr.mxu0 0.0
        %1312 = vmatpush1.msra.mxu0 0.0
        %1313 = vmatprep.subr.mxu0 0.0
        %1314 = vmatpush1.msra.mxu0 0.0
        %1315 = vmatprep.subr.mxu0 0.0
        %1316 = vmatpush1.msra.mxu0 0.0
        %1317 = vmatprep.subr.mxu0 0.0
        %1318 = vmatpush1.msra.mxu0 0.0
        %1319 = vmatprep.subr.mxu0 0.0
        %1320 = vmatpush1.msra.mxu0 0.0
        %1321 = vmatprep.subr.mxu0 0.0
        %1322 = vmatpush1.msra.mxu0 0.0
        %1323 = vmatprep.subr.mxu0 0.0
        %1324 = vmatpush1.msra.mxu0 0.0
        %1325 = vmatprep.subr.mxu0 0.0
        %1326 = vmatpush1.msra.mxu0 0.0
        %1327 = vmatprep.subr.mxu0 0.0
        %1328 = vmatpush1.msra.mxu0 0.0
        %1329 = vmatprep.subr.mxu0 0.0
        %1330 = vmatpush1.msra.mxu0 0.0
        %1331 = vmatprep.subr.mxu0 0.0
        %1332 = vmatpush1.msra.mxu0 0.0
        %1333 = vmatprep.subr.mxu0 0.0
        %1334 = vmatpush1.msra.mxu0 0.0
        %1335 = vmatprep.subr.mxu0 0.0
        %1336 = vmatpush1.msra.mxu0 0.0
        %1337 = vmatprep.subr.mxu0 0.0
        %1338 = vmatpush1.msra.mxu0 0.0
        %1339 = vmatprep.subr.mxu0 0.0
        %1340 = vmatpush1.msra.mxu0 0.0
        %1341 = vmatprep.subr.mxu0 0.0
        %1342 = vmatpush1.msra.mxu0 0.0
        %1343 = vmatprep.subr.mxu0 0.0
        %1344 = vmatpush1.msra.mxu0 0.0
        %1345 = vmatprep.subr.mxu0 0.0
        %1346 = vmatpush1.msra.mxu0 0.0
        %1347 = vmatprep.subr.mxu0 0.0
        %1348 = vmatpush1.msra.mxu0 0.0
        %1349 = vmatprep.subr.mxu0 0.0
        %1350 = vmatpush1.msra.mxu0 0.0
        %1351 = vmatprep.subr.mxu0 0.0
        %1352 = vmatpush1.msra.mxu0 0.0
        %1353 = vmatprep.subr.mxu0 0.0
        %1354 = vmatpush1.msra.mxu0 0.0
        %1355 = vmatprep.subr.mxu0 0.0
        %1356 = vmatpush1.msra.mxu0 0.0
        %1357 = vmatprep.subr.mxu0 0.0
        %1358 = vmatpush1.msra.mxu0 0.0
        %1359 = vmatprep.mubr.f32.mxu0 0.0
        %1360 = vmatmul.mubr.f32.gmra.mrb[0].mxu0 %v1222
        %v1361 = vpop.f32.mrb[0].mxu0
        %v1362 = vadd.f32 %v1219, %v1361
        %v1363 = vpop.f32.mrb[0].mxu0
        %1364 = vdwg.mxu0
        %v1365 = vadd.f32 %v1211, %v1291
        %v1366 = vadd.f32 %v1212, %v1293
        %v1367 = vadd.f32 %v1213, %v1362
        %v1368 = vmax.f32 %v1365, 0.0
        %v1369 = vmax.f32 %v1366, 0.0
        %v1370 = vmax.f32 %v1367, 0.0
        %1371 = vst [vmem:[%s220] sm:$0xff] %v1368
        %1372 = vst [vmem:[%s220 + $0x8] sm:$0xff] %v1369
        %1373 = vst [vmem:[%s220 + $0x10] sm:$0xff] %v1370
        %s1374 = sand.u32 %s127, 1
        %s1375 = scalar_lea.sflag [#allocation6], %s1374
        %s1376 = sand.u32 %s127, 1
        %s1377 = smul.addr %s1376, 24
        %s1378 = scalar_lea.vmem [#allocation9], %s1377
        // Predicated region
        $region49: #{tpu_custom_call.1} parent=35 // pred_check
          %p1379 = pneg %p137
        $region50: #{tpu_custom_call.1} parent=35 // pred_check_branch
          %1381 = sbr.rel (%p1379) target = $region52
        $region51: #{tpu_custom_call.1} parent=35 // pred_region
          %s1382 = smul.u32 3, %s26
          %s1384 = ssub.s32 384, 384
          %1385 = vsyncadd %s1375, %s1384
          %s1386 = smul.addr %s25, 3
          %s1387 = sadd.s32 %s1382, %s1386
          %s1388 = smul.addr %s1387, 128
          %s1389 = scalar_lea.hbm %s5, %s1388
          %s1391 = sshll.u32 %s1378, 4
          %s1392 = int_to_ptr.vmem [resolvable:$true] %s1391
          %1394 = dma.vmem_to_hbm [thread:$0]  %s1392, 384, %s1389, %s1375
        $region52: #{tpu_custom_call.1} parent=35 // pred_fallthru
          _
      $region36: #{tpu_custom_call.1} parent=5 // pred_fallthru
        _
      %p1395 = scmp.le.s32.totalorder 2, %s16
      // Predicated region
      $region53: #{tpu_custom_call.1} parent=5 // pred_check
        %p1396 = pneg %p1395
      $region54: #{tpu_custom_call.1} parent=5 // pred_check_branch
        %1398 = sbr.rel (%p1396) target = $region56
      $region55: #{tpu_custom_call.1} parent=5 // pred_region
        %s1399 = ssub.s32 %s16, 2
        // Predicated region
        $region57: #{tpu_custom_call.1} parent=55 // pred_check
          %p1400 = pneg %p143
        $region58: #{tpu_custom_call.1} parent=55 // pred_check_branch
          %1402 = sbr.rel (%p1400) target = $region60
        $region59: #{tpu_custom_call.1} parent=55 // pred_region
          %s1403 = sand.u32 %s128, 1
          %s1404 = scalar_lea.sflag [#allocation6], %s1403
          %s1405 = sand.u32 %s128, 1
          %s1406 = smul.addr %s1405, 24
          %s1407 = scalar_lea.vmem [#allocation9], %s1406
          %1408 = dma.done %s1404, 384
        $region60: #{tpu_custom_call.1} parent=55 // pred_fallthru
          _
      $region56: #{tpu_custom_call.1} parent=5 // pred_fallthru
        _
    $region6: #{tpu_custom_call.1} parent=1 // loop_footer
      %s20 = sadd.s32 1, %s16
    $region7: #{tpu_custom_call.1} parent=1 // loop_footer_branch
      %15 = sbr.rel target = $region3
    $region8: #{tpu_custom_call.1} parent=1 // loop_exit
      _
    %1409 = vsyncpa [#allocation5], 1
    %s1410 = scalar_lea.sflag [#allocation5], 1
    %1411 = vsyncpa %s1410, 1
    %1412 = vsyncpa [#allocation8], 1
    %1413 = vsyncpa [#allocation6], 1
    %s1414 = scalar_lea.sflag [#allocation6], 1
    %1415 = vsyncpa %s1414, 1
  %1416 = vsyncmov [#allocation3]
  %s1417 = vpop.sfrf %1416
  %p1418 = scmp.eq.s32.totalorder %s1417, 0
  %p1419 = pneg %p1418
  %1421 = shalt.err (%p1419)

</llo_original>
